<compile_context>
chip_gen: v5e
topology: v5e:2x2
jax: 0.10.0
libtpu: 0.0.40
codegen_flags: <defaults>
</compile_context>

<pallas_src>
import functools

import numpy as np

import jax
import jax.numpy as jnp
from jax.experimental import pallas as pl
from jax.experimental.pallas import tpu as pltpu


TB = 64        # images per grid step (batch tile)
_KW = 5        # conv kernel size


def _round_up(n, m):
    return ((n + m - 1) // m) * m


# ---------------------------------------------------------------------------
# Wrapper-side weight folding (tiny, runs once per call under jit).
# All folded weights are independent of the batch-tile size.
# ---------------------------------------------------------------------------
def _build_t1(w1):
    """(168, 512) bf16 banded conv1 weight.

    LHS row r = b*14 + Y carries input rows 2Y..2Y+5 as 3 concatenated 56-lane
    row pairs: column 56*d + 28*q + x  <->  in[b, 2Y + 2d + q, x].
    Output lane L = p*256 + s*128 + X*10 + c  <->  conv1[b, c, 2Y+p, 2X+s],
    so pool1 is simply the max of the four 128-lane quarters."""
    w10 = w1[:, 0]                                              # (cout, ki, kj)
    d = np.arange(3).reshape(3, 1, 1, 1, 1, 1, 1)
    q = np.arange(2).reshape(1, 2, 1, 1, 1, 1, 1)
    x = np.arange(28).reshape(1, 1, 28, 1, 1, 1, 1)
    p = np.arange(2).reshape(1, 1, 1, 2, 1, 1, 1)
    s = np.arange(2).reshape(1, 1, 1, 1, 2, 1, 1)
    X = np.arange(12).reshape(1, 1, 1, 1, 1, 12, 1)
    c = np.arange(10).reshape(1, 1, 1, 1, 1, 1, 10)
    ki = 2 * d + q - p
    kj = x - 2 * X - s
    valid = ((ki >= 0) & (ki < _KW) & (kj >= 0) & (kj < _KW)).astype(np.float32)
    kic = np.clip(ki, 0, _KW - 1)
    kjc = np.clip(kj, 0, _KW - 1)
    t = w10[c, kic, kjc] * valid                                # (3,2,28,2,2,12,10)
    t = t.reshape(168, 2, 2, 120)
    t = jnp.pad(t, ((0, 0), (0, 0), (0, 0), (0, 8)))            # 120 -> 128 lanes
    return t.reshape(168, 512).astype(jnp.bfloat16)


def _build_bias1(b1):
    g = jnp.pad(jnp.tile(b1, 12), (0, 8))                       # (128,) = b1[c] at X*10+c
    return jnp.tile(g, 4).reshape(1, 512).astype(jnp.float32)


def _build_t2(w2):
    """(640, 256) bf16 banded conv2 weight (all 5 y-taps packed along K).

    LHS column 128*j + X*10 + c1  <->  pooled1[b, c1, v + j, X] for output row v.
    Output lane su*128 + U*20 + c2  <->  conv2[b, c2, v, 2U+su], so pool2's
    x-direction max is the max of the two 128-lane halves."""
    j = np.arange(5).reshape(5, 1, 1, 1, 1, 1)
    X = np.arange(12).reshape(1, 12, 1, 1, 1, 1)
    c1 = np.arange(10).reshape(1, 1, 10, 1, 1, 1)
    su = np.arange(2).reshape(1, 1, 1, 2, 1, 1)
    U = np.arange(4).reshape(1, 1, 1, 1, 4, 1)
    c2 = np.arange(20).reshape(1, 1, 1, 1, 1, 20)
    kj = X - 2 * U - su
    valid = ((kj >= 0) & (kj < _KW)).astype(np.float32)
    kjc = np.clip(kj, 0, _KW - 1)
    t = w2[c2, c1, j, kjc] * valid                              # (5,12,10,2,4,20)
    t = t.reshape(5, 120, 2, 80)
    t = jnp.pad(t, ((0, 0), (0, 8), (0, 0), (0, 48)))           # rows->128, cols->128
    return t.reshape(640, 256).astype(jnp.bfloat16)


def _build_bias2(b2):
    g = jnp.pad(jnp.tile(b2, 4), (0, 48))                       # (128,) = b2[c2] at U*20+c2
    return jnp.tile(g, 2).reshape(1, 256).astype(jnp.float32)


def _build_w1f(fc1_w):
    """(512, 64) bf16: fc1 with PyTorch's (C,H,W) flatten folded in.

    Row 128*y2 + x2*20 + c2 multiplies pooled2[b, c2, y2, x2]; outputs padded
    50 -> 64 lanes."""
    wt = fc1_w.reshape(50, 20, 4, 4)                            # (o, c2, y2, x2)
    wt = jnp.transpose(wt, (2, 3, 1, 0)).reshape(4, 80, 50)     # row-in-group = x2*20+c2
    wt = jnp.pad(wt, ((0, 0), (0, 48), (0, 14)))                # 80->128 rows, 50->64 out
    return wt.reshape(512, 64).astype(jnp.bfloat16)


def _build_w2f(fc2_w):
    """(64, 128) bf16: fc2 weight, pre-transposed and lane-padded."""
    return jnp.pad(fc2_w.T, ((0, 14), (0, 118))).astype(jnp.bfloat16)


# ---------------------------------------------------------------------------
# The fused kernel (one batch tile per grid step).
# Row space: row r = b*14 + Y (one row per pool1 output y).
# ---------------------------------------------------------------------------
def _fused_kernel(xp_ref, t1_ref, b1_ref, t2_ref, b2_ref,
                  w1f_ref, bf1_ref, w2f_ref, bf2_ref,
                  o_ref, p1c_s, p2_s, *, tb):
    f32 = jnp.float32
    bf16 = jnp.bfloat16
    mc = 14 * tb - 2       # conv1/pool1 rows computed (valid Y in [0,12) per image)
    m2 = 14 * tb - 6       # conv2 rows computed (valid v in [0,8) per image)
    m2p = m2 - 1           # rows after pool2's y-direction max

    # ---- conv1 + bias + ReLU + pool1, one K=168 matmul ----------------------
    xc1 = jnp.concatenate([xp_ref[pl.ds(d, mc), :] for d in range(3)], axis=1)
    h1 = jnp.dot(xc1, t1_ref[...], preferred_element_type=f32)   # (mc, 512)
    h1 = jnp.maximum(h1 + b1_ref[...], 0.0)
    p1 = jnp.maximum(jnp.maximum(h1[:, 0:128], h1[:, 128:256]),
                     jnp.maximum(h1[:, 256:384], h1[:, 384:512]))
    p1c_s[pl.ds(0, mc), :] = p1.astype(bf16)                     # pooled1, compact rows

    # ---- conv2 + bias + ReLU, 5 y-taps packed into one K=640 matmul ---------
    xc2 = jnp.concatenate([p1c_s[pl.ds(j, m2), :] for j in range(5)], axis=1)
    a2 = jnp.dot(xc2, t2_ref[...], preferred_element_type=f32)   # (m2, 256)
    a2 = jnp.maximum(a2 + b2_ref[...], 0.0)

    # ---- pool2: adjacent-row max (y) then max of the two 128-lane halves (x)
    ty = jnp.maximum(a2[0:m2p, :], a2[1:m2p + 1, :])
    p2_s[pl.ds(0, m2p), :] = jnp.maximum(ty[:, 0:128], ty[:, 128:256])

    # ---- fc1: stride-14 row gathers (4 pooled2 rows per image), flatten folded
    gath = jnp.concatenate(
        [p2_s[pl.ds(2 * y2, tb, stride=14), :] for y2 in range(4)], axis=1)
    hf = jnp.dot(gath.astype(bf16), w1f_ref[...], preferred_element_type=f32)
    hf = jnp.maximum(hf + bf1_ref[...], 0.0)                     # (tb, 64)

    # ---- fc2 + ReLU (matches the reference module), lane-dense output -------
    out = jnp.dot(hf.astype(bf16), w2f_ref[...], preferred_element_type=f32)
    o_ref[...] = jnp.maximum(out + bf2_ref[...], 0.0)            # (tb, 128)


# ---------------------------------------------------------------------------
# Forward pass wrapper
# ---------------------------------------------------------------------------
def mnist_convnet_forward(x_nchw, params):
    B, C, H, W = x_nchw.shape
    assert C == 1 and H == 28 and W == 28, "MNISTConvNet expects (B, 1, 28, 28)"

    tb = TB if B >= TB else max(8, _round_up(B, 8))
    nb = -(-B // tb)
    b_pad = nb * tb

    x = x_nchw.reshape(B, 28, 28).astype(jnp.float32)
    if b_pad != B:
        x = jnp.pad(x, ((0, b_pad - B), (0, 0), (0, 0)))
    # Row-pair layout: row (b*14 + Y) holds input rows 2Y and 2Y+1 (56 lanes).
    xp = x.reshape(b_pad * 14, 56).astype(jnp.bfloat16)

    t1 = _build_t1(params["w1"])
    b1r = _build_bias1(params["b1"])
    t2 = _build_t2(params["w2"])
    b2r = _build_bias2(params["b2"])
    w1f = _build_w1f(params["fc1_w"])
    bf1 = jnp.pad(params["fc1_b"], (0, 14)).reshape(1, 64).astype(jnp.float32)
    w2f = _build_w2f(params["fc2_w"])
    bf2 = jnp.pad(params["fc2_b"], (0, 118)).reshape(1, 128).astype(jnp.float32)

    grid_spec = pltpu.PrefetchScalarGridSpec(
        num_scalar_prefetch=0,
        grid=(nb,),
        in_specs=[
            pl.BlockSpec((14 * tb, 56), lambda t: (t, 0)),       # input batch tile
            pl.BlockSpec((168, 512), lambda t: (0, 0)),          # conv1 banded weight
            pl.BlockSpec((1, 512), lambda t: (0, 0)),            # conv1 bias row
            pl.BlockSpec((640, 256), lambda t: (0, 0)),          # conv2 banded weight
            pl.BlockSpec((1, 256), lambda t: (0, 0)),            # conv2 bias row
            pl.BlockSpec((512, 64), lambda t: (0, 0)),           # fc1 (flatten folded)
            pl.BlockSpec((1, 64), lambda t: (0, 0)),             # fc1 bias
            pl.BlockSpec((64, 128), lambda t: (0, 0)),           # fc2 weight (pre-T, padded)
            pl.BlockSpec((1, 128), lambda t: (0, 0)),            # fc2 bias
        ],
        out_specs=pl.BlockSpec((tb, 128), lambda t: (t, 0)),
        scratch_shapes=[
            pltpu.VMEM((14 * tb, 128), jnp.bfloat16),            # pooled1 (compact rows)
            pltpu.VMEM((14 * tb, 128), jnp.float32),             # pooled2 (row space)
        ],
    )

    out = pl.pallas_call(
        functools.partial(_fused_kernel, tb=tb),
        out_shape=jax.ShapeDtypeStruct((b_pad, 128), jnp.float32),
        grid_spec=grid_spec,
        compiler_params=pltpu.CompilerParams(
            dimension_semantics=("parallel",),
            vmem_limit_bytes=48 * 1024 * 1024),
    )(xp, t1, b1r, t2, b2r, w1f, bf1, w2f, bf2)
    return out[:B, :10]


# ---------------------------------------------------------------------------
# Deterministic parameter init (shapes from MNISTConvNet.__init__)
# ---------------------------------------------------------------------------
def init_params(key):
    ks = jax.random.split(key, 8)
    s = 0.1
    return {
        "w1": s * jax.random.normal(ks[0], (10, 1, 5, 5), jnp.float32),
        "b1": s * jax.random.normal(ks[1], (10,), jnp.float32),
        "w2": s * jax.random.normal(ks[2], (20, 10, 5, 5), jnp.float32),
        "b2": s * jax.random.normal(ks[3], (20,), jnp.float32),
        "fc1_w": s * jax.random.normal(ks[4], (50, 320), jnp.float32),  # PyTorch (out, in)
        "fc1_b": s * jax.random.normal(ks[5], (50,), jnp.float32),
        "fc2_w": s * jax.random.normal(ks[6], (10, 50), jnp.float32),
        "fc2_b": s * jax.random.normal(ks[7], (10,), jnp.float32),
    }


# ---------------------------------------------------------------------------
# Pure-JAX reference (mirrors the PyTorch module, incl. ReLU on fc2)
# ---------------------------------------------------------------------------
def reference_forward(x_nchw, params):
    dn = ("NCHW", "OIHW", "NCHW")
    prec = jax.lax.Precision.HIGHEST
    x = jax.lax.conv_general_dilated(x_nchw, params["w1"], (1, 1), "VALID",
                                     dimension_numbers=dn, precision=prec)
    x = jnp.maximum(x + params["b1"].reshape(1, -1, 1, 1), 0.0)
    x = jax.lax.reduce_window(x, -jnp.inf, jax.lax.max, (1, 1, 2, 2), (1, 1, 2, 2), "VALID")
    x = jax.lax.conv_general_dilated(x, params["w2"], (1, 1), "VALID",
                                     dimension_numbers=dn, precision=prec)
    x = jnp.maximum(x + params["b2"].reshape(1, -1, 1, 1), 0.0)
    x = jax.lax.reduce_window(x, -jnp.inf, jax.lax.max, (1, 1, 2, 2), (1, 1, 2, 2), "VALID")
    x = x.reshape(x.shape[0], -1)
    x = jnp.maximum(jnp.dot(x, params["fc1_w"].T, precision=prec) + params["fc1_b"], 0.0)
    x = jnp.maximum(jnp.dot(x, params["fc2_w"].T, precision=prec) + params["fc2_b"], 0.0)
    return x


if __name__ == "__main__":
    key = jax.random.PRNGKey(0)
    k_param, k_x = jax.random.split(key)
    params = init_params(k_param)
    # Spatial size must be 28 so the conv/pool stack yields 20*4*4 = 320 for fc1.
    x = jax.random.normal(k_x, (2, 1, 28, 28), jnp.float32)

    fwd = jax.jit(mnist_convnet_forward)
    out = jax.block_until_ready(fwd(x, params))
    assert out.shape == (2, 10)

    ref = jax.block_until_ready(reference_forward(x, params))
    max_err = float(jnp.max(jnp.abs(out - ref)))
    # bf16 matmul operands through 4 layers (f32 accumulation): expect O(1e-2)
    # absolute error against the f32/HIGHEST reference.
    assert jnp.allclose(out, ref, rtol=1e-1, atol=1e-1), max_err

    print("KERNEL_OK")
</pallas_src>

<mosaic_0001>
module attributes {stable_mosaic.version = 11 : i64} {
  func.func @_fused_kernel(%arg0: i32, %arg1: memref<112x56xbf16, #tpu.memory_space<vmem>>, %arg2: memref<168x512xbf16, #tpu.memory_space<vmem>>, %arg3: memref<1x512xf32, #tpu.memory_space<vmem>>, %arg4: memref<640x256xbf16, #tpu.memory_space<vmem>>, %arg5: memref<1x256xf32, #tpu.memory_space<vmem>>, %arg6: memref<512x64xbf16, #tpu.memory_space<vmem>>, %arg7: memref<1x64xf32, #tpu.memory_space<vmem>>, %arg8: memref<64x128xbf16, #tpu.memory_space<vmem>>, %arg9: memref<1x128xf32, #tpu.memory_space<vmem>>, %arg10: memref<8x128xf32, #tpu.memory_space<vmem>>, %arg11: memref<112x128xbf16, #tpu.memory_space<vmem>>, %arg12: memref<112x128xf32, #tpu.memory_space<vmem>>) attributes {dimension_semantics = [#tpu.dimension_semantics<parallel>], iteration_bounds = array<i64: 1>, scalar_prefetch = 0 : i64, scratch_operands = 2 : i64, tpu.core_type = #tpu.core_type<tc>, window_params = [{transform_indices = @transform_0, window_bounds = array<i64: 112, 56>}, {pipeline_mode = #tpu.pipeline_mode<synchronous>, transform_indices = @transform_1, window_bounds = array<i64: 168, 512>}, {pipeline_mode = #tpu.pipeline_mode<synchronous>, transform_indices = @transform_2, window_bounds = array<i64: 1, 512>}, {pipeline_mode = #tpu.pipeline_mode<synchronous>, transform_indices = @transform_3, window_bounds = array<i64: 640, 256>}, {pipeline_mode = #tpu.pipeline_mode<synchronous>, transform_indices = @transform_4, window_bounds = array<i64: 1, 256>}, {pipeline_mode = #tpu.pipeline_mode<synchronous>, transform_indices = @transform_5, window_bounds = array<i64: 512, 64>}, {pipeline_mode = #tpu.pipeline_mode<synchronous>, transform_indices = @transform_6, window_bounds = array<i64: 1, 64>}, {pipeline_mode = #tpu.pipeline_mode<synchronous>, transform_indices = @transform_7, window_bounds = array<i64: 64, 128>}, {pipeline_mode = #tpu.pipeline_mode<synchronous>, transform_indices = @transform_8, window_bounds = array<i64: 1, 128>}, {transform_indices = @transform_9, window_bounds = array<i64: 8, 128>}]} {
    %c0 = arith.constant 0 : index
    %c0_0 = arith.constant 0 : index
    %0 = vector.load %arg1[%c0, %c0_0] : memref<112x56xbf16, #tpu.memory_space<vmem>>, vector<110x56xbf16>
    %c1 = arith.constant 1 : index
    %c0_1 = arith.constant 0 : index
    %1 = vector.load %arg1[%c1, %c0_1] : memref<112x56xbf16, #tpu.memory_space<vmem>>, vector<110x56xbf16>
    %c2 = arith.constant 2 : index
    %c0_2 = arith.constant 0 : index
    %2 = vector.load %arg1[%c2, %c0_2] : memref<112x56xbf16, #tpu.memory_space<vmem>>, vector<110x56xbf16>
    %3 = tpu.concatenate %0, %1, %2 in 1 : vector<110x56xbf16>, vector<110x56xbf16>, vector<110x56xbf16> -> vector<110x168xbf16>
    %c0_3 = arith.constant 0 : index
    %c0_4 = arith.constant 0 : index
    %4 = vector.load %arg2[%c0_3, %c0_4] : memref<168x512xbf16, #tpu.memory_space<vmem>>, vector<168x512xbf16>
    %cst = arith.constant dense<0.000000e+00> : vector<110x512xf32>
    %5 = tpu.matmul %3, %4, %cst {dimension_numbers = #tpu.dot_dimension_numbers<[1], [0], [0], [1], [0, 0, 1, 1], [], []>} : vector<110x168xbf16>, vector<168x512xbf16>, vector<110x512xf32> -> vector<110x512xf32>
    %c0_5 = arith.constant 0 : index
    %c0_6 = arith.constant 0 : index
    %6 = vector.load %arg3[%c0_5, %c0_6] : memref<1x512xf32, #tpu.memory_space<vmem>>, vector<1x512xf32>
    %7 = vector.broadcast %6 : vector<1x512xf32> to vector<110x512xf32>
    %8 = arith.addf %5, %7 : vector<110x512xf32>
    %cst_7 = arith.constant 0.000000e+00 : f32
    %9 = vector.broadcast %cst_7 : f32 to vector<110x512xf32>
    %10 = arith.maximumf %8, %9 : vector<110x512xf32>
    %11 = vector.extract_strided_slice %10 {offsets = [0, 0], sizes = [110, 128], strides = [1, 1]} : vector<110x512xf32> to vector<110x128xf32>
    %12 = vector.extract_strided_slice %10 {offsets = [0, 128], sizes = [110, 128], strides = [1, 1]} : vector<110x512xf32> to vector<110x128xf32>
    %13 = arith.maximumf %11, %12 : vector<110x128xf32>
    %14 = vector.extract_strided_slice %10 {offsets = [0, 256], sizes = [110, 128], strides = [1, 1]} : vector<110x512xf32> to vector<110x128xf32>
    %15 = vector.extract_strided_slice %10 {offsets = [0, 384], sizes = [110, 128], strides = [1, 1]} : vector<110x512xf32> to vector<110x128xf32>
    %16 = arith.maximumf %14, %15 : vector<110x128xf32>
    %17 = arith.maximumf %13, %16 : vector<110x128xf32>
    %18 = arith.truncf %17 : vector<110x128xf32> to vector<110x128xbf16>
    %c0_8 = arith.constant 0 : index
    %c0_9 = arith.constant 0 : index
    %19 = vector.load %arg11[%c0_8, %c0_9] : memref<112x128xbf16, #tpu.memory_space<vmem>>, vector<110x128xbf16>
    tpu.vector_store %arg11[%c0_8, %c0_9], %18 {strides = array<i32>} : memref<112x128xbf16, #tpu.memory_space<vmem>>, vector<110x128xbf16>,
    %c0_10 = arith.constant 0 : index
    %c0_11 = arith.constant 0 : index
    %20 = vector.load %arg11[%c0_10, %c0_11] : memref<112x128xbf16, #tpu.memory_space<vmem>>, vector<106x128xbf16>
    %c1_12 = arith.constant 1 : index
    %c0_13 = arith.constant 0 : index
    %21 = vector.load %arg11[%c1_12, %c0_13] : memref<112x128xbf16, #tpu.memory_space<vmem>>, vector<106x128xbf16>
    %c2_14 = arith.constant 2 : index
    %c0_15 = arith.constant 0 : index
    %22 = vector.load %arg11[%c2_14, %c0_15] : memref<112x128xbf16, #tpu.memory_space<vmem>>, vector<106x128xbf16>
    %c3 = arith.constant 3 : index
    %c0_16 = arith.constant 0 : index
    %23 = vector.load %arg11[%c3, %c0_16] : memref<112x128xbf16, #tpu.memory_space<vmem>>, vector<106x128xbf16>
    %c4 = arith.constant 4 : index
    %c0_17 = arith.constant 0 : index
    %24 = vector.load %arg11[%c4, %c0_17] : memref<112x128xbf16, #tpu.memory_space<vmem>>, vector<106x128xbf16>
    %25 = tpu.concatenate %20, %21, %22, %23, %24 in 1 : vector<106x128xbf16>, vector<106x128xbf16>, vector<106x128xbf16>, vector<106x128xbf16>, vector<106x128xbf16> -> vector<106x640xbf16>
    %c0_18 = arith.constant 0 : index
    %c0_19 = arith.constant 0 : index
    %26 = vector.load %arg4[%c0_18, %c0_19] : memref<640x256xbf16, #tpu.memory_space<vmem>>, vector<640x256xbf16>
    %cst_20 = arith.constant dense<0.000000e+00> : vector<106x256xf32>
    %27 = tpu.matmul %25, %26, %cst_20 {dimension_numbers = #tpu.dot_dimension_numbers<[1], [0], [0], [1], [0, 0, 1, 1], [], []>} : vector<106x640xbf16>, vector<640x256xbf16>, vector<106x256xf32> -> vector<106x256xf32>
    %c0_21 = arith.constant 0 : index
    %c0_22 = arith.constant 0 : index
    %28 = vector.load %arg5[%c0_21, %c0_22] : memref<1x256xf32, #tpu.memory_space<vmem>>, vector<1x256xf32>
    %29 = vector.broadcast %28 : vector<1x256xf32> to vector<106x256xf32>
    %30 = arith.addf %27, %29 : vector<106x256xf32>
    %cst_23 = arith.constant 0.000000e+00 : f32
    %31 = vector.broadcast %cst_23 : f32 to vector<106x256xf32>
    %32 = arith.maximumf %30, %31 : vector<106x256xf32>
    %33 = vector.extract_strided_slice %32 {offsets = [0, 0], sizes = [105, 256], strides = [1, 1]} : vector<106x256xf32> to vector<105x256xf32>
    %34 = vector.extract_strided_slice %32 {offsets = [1, 0], sizes = [105, 256], strides = [1, 1]} : vector<106x256xf32> to vector<105x256xf32>
    %35 = arith.maximumf %33, %34 : vector<105x256xf32>
    %36 = vector.extract_strided_slice %35 {offsets = [0, 0], sizes = [105, 128], strides = [1, 1]} : vector<105x256xf32> to vector<105x128xf32>
    %37 = vector.extract_strided_slice %35 {offsets = [0, 128], sizes = [105, 128], strides = [1, 1]} : vector<105x256xf32> to vector<105x128xf32>
    %38 = arith.maximumf %36, %37 : vector<105x128xf32>
    %c0_24 = arith.constant 0 : index
    %c0_25 = arith.constant 0 : index
    %39 = vector.load %arg12[%c0_24, %c0_25] : memref<112x128xf32, #tpu.memory_space<vmem>>, vector<105x128xf32>
    tpu.vector_store %arg12[%c0_24, %c0_25], %38 {strides = array<i32>} : memref<112x128xf32, #tpu.memory_space<vmem>>, vector<105x128xf32>,
    %c0_26 = arith.constant 0 : index
    %c0_27 = arith.constant 0 : index
    %40 = tpu.strided_load %arg12[%c0_26, %c0_27] {strides = array<i32: 14, 1>} : memref<112x128xf32, #tpu.memory_space<vmem>>, vector<8x128xf32>
    %c2_28 = arith.constant 2 : index
    %c0_29 = arith.constant 0 : index
    %41 = tpu.strided_load %arg12[%c2_28, %c0_29] {strides = array<i32: 14, 1>} : memref<112x128xf32, #tpu.memory_space<vmem>>, vector<8x128xf32>
    %c4_30 = arith.constant 4 : index
    %c0_31 = arith.constant 0 : index
    %42 = tpu.strided_load %arg12[%c4_30, %c0_31] {strides = array<i32: 14, 1>} : memref<112x128xf32, #tpu.memory_space<vmem>>, vector<8x128xf32>
    %c6 = arith.constant 6 : index
    %c0_32 = arith.constant 0 : index
    %43 = tpu.strided_load %arg12[%c6, %c0_32] {strides = array<i32: 14, 1>} : memref<112x128xf32, #tpu.memory_space<vmem>>, vector<8x128xf32>
    %44 = tpu.concatenate %40, %41, %42, %43 in 1 : vector<8x128xf32>, vector<8x128xf32>, vector<8x128xf32>, vector<8x128xf32> -> vector<8x512xf32>
    %45 = arith.truncf %44 : vector<8x512xf32> to vector<8x512xbf16>
    %c0_33 = arith.constant 0 : index
    %c0_34 = arith.constant 0 : index
    %46 = vector.load %arg6[%c0_33, %c0_34] : memref<512x64xbf16, #tpu.memory_space<vmem>>, vector<512x64xbf16>
    %cst_35 = arith.constant dense<0.000000e+00> : vector<8x64xf32>
    %47 = tpu.matmul %45, %46, %cst_35 {dimension_numbers = #tpu.dot_dimension_numbers<[1], [0], [0], [1], [0, 0, 1, 1], [], []>} : vector<8x512xbf16>, vector<512x64xbf16>, vector<8x64xf32> -> vector<8x64xf32>
    %c0_36 = arith.constant 0 : index
    %c0_37 = arith.constant 0 : index
    %48 = vector.load %arg7[%c0_36, %c0_37] : memref<1x64xf32, #tpu.memory_space<vmem>>, vector<1x64xf32>
    %49 = vector.broadcast %48 : vector<1x64xf32> to vector<8x64xf32>
    %50 = arith.addf %47, %49 : vector<8x64xf32>
    %cst_38 = arith.constant 0.000000e+00 : f32
    %51 = vector.broadcast %cst_38 : f32 to vector<8x64xf32>
    %52 = arith.maximumf %50, %51 : vector<8x64xf32>
    %53 = arith.truncf %52 : vector<8x64xf32> to vector<8x64xbf16>
    %c0_39 = arith.constant 0 : index
    %c0_40 = arith.constant 0 : index
    %54 = vector.load %arg8[%c0_39, %c0_40] : memref<64x128xbf16, #tpu.memory_space<vmem>>, vector<64x128xbf16>
    %cst_41 = arith.constant dense<0.000000e+00> : vector<8x128xf32>
    %55 = tpu.matmul %53, %54, %cst_41 {dimension_numbers = #tpu.dot_dimension_numbers<[1], [0], [0], [1], [0, 0, 1, 1], [], []>} : vector<8x64xbf16>, vector<64x128xbf16>, vector<8x128xf32> -> vector<8x128xf32>
    %c0_42 = arith.constant 0 : index
    %c0_43 = arith.constant 0 : index
    %56 = vector.load %arg9[%c0_42, %c0_43] : memref<1x128xf32, #tpu.memory_space<vmem>>, vector<1x128xf32>
    %57 = vector.broadcast %56 : vector<1x128xf32> to vector<8x128xf32>
    %58 = arith.addf %55, %57 : vector<8x128xf32>
    %cst_44 = arith.constant 0.000000e+00 : f32
    %59 = vector.broadcast %cst_44 : f32 to vector<8x128xf32>
    %60 = arith.maximumf %58, %59 : vector<8x128xf32>
    %c0_45 = arith.constant 0 : index
    %c0_46 = arith.constant 0 : index
    %61 = vector.load %arg10[%c0_45, %c0_46] : memref<8x128xf32, #tpu.memory_space<vmem>>, vector<8x128xf32>
    tpu.vector_store %arg10[%c0_45, %c0_46], %60 {strides = array<i32>} : memref<8x128xf32, #tpu.memory_space<vmem>>, vector<8x128xf32>,
    return
  }
  func.func @transform_0(%arg0: i32) -> (i32, i32) {
    %c0_i32 = arith.constant 0 : i32
    %c0_i32_0 = arith.constant 0 : i32
    return %arg0, %c0_i32 : i32, i32
  }
  func.func @transform_1(%arg0: i32) -> (i32, i32) {
    %c0_i32 = arith.constant 0 : i32
    %c0_i32_0 = arith.constant 0 : i32
    %c0_i32_1 = arith.constant 0 : i32
    return %c0_i32, %c0_i32_0 : i32, i32
  }
  func.func @transform_2(%arg0: i32) -> (i32, i32) {
    %c0_i32 = arith.constant 0 : i32
    %c0_i32_0 = arith.constant 0 : i32
    %c0_i32_1 = arith.constant 0 : i32
    return %c0_i32, %c0_i32_0 : i32, i32
  }
  func.func @transform_3(%arg0: i32) -> (i32, i32) {
    %c0_i32 = arith.constant 0 : i32
    %c0_i32_0 = arith.constant 0 : i32
    %c0_i32_1 = arith.constant 0 : i32
    return %c0_i32, %c0_i32_0 : i32, i32
  }
  func.func @transform_4(%arg0: i32) -> (i32, i32) {
    %c0_i32 = arith.constant 0 : i32
    %c0_i32_0 = arith.constant 0 : i32
    %c0_i32_1 = arith.constant 0 : i32
    return %c0_i32, %c0_i32_0 : i32, i32
  }
  func.func @transform_5(%arg0: i32) -> (i32, i32) {
    %c0_i32 = arith.constant 0 : i32
    %c0_i32_0 = arith.constant 0 : i32
    %c0_i32_1 = arith.constant 0 : i32
    return %c0_i32, %c0_i32_0 : i32, i32
  }
  func.func @transform_6(%arg0: i32) -> (i32, i32) {
    %c0_i32 = arith.constant 0 : i32
    %c0_i32_0 = arith.constant 0 : i32
    %c0_i32_1 = arith.constant 0 : i32
    return %c0_i32, %c0_i32_0 : i32, i32
  }
  func.func @transform_7(%arg0: i32) -> (i32, i32) {
    %c0_i32 = arith.constant 0 : i32
    %c0_i32_0 = arith.constant 0 : i32
    %c0_i32_1 = arith.constant 0 : i32
    return %c0_i32, %c0_i32_0 : i32, i32
  }
  func.func @transform_8(%arg0: i32) -> (i32, i32) {
    %c0_i32 = arith.constant 0 : i32
    %c0_i32_0 = arith.constant 0 : i32
    %c0_i32_1 = arith.constant 0 : i32
    return %c0_i32, %c0_i32_0 : i32, i32
  }
  func.func @transform_9(%arg0: i32) -> (i32, i32) {
    %c0_i32 = arith.constant 0 : i32
    %c0_i32_0 = arith.constant 0 : i32
    return %arg0, %c0_i32 : i32, i32
  }
}

</mosaic_0001>

<llo_original>
// kernel: tile.23
$region0: #{tile.23}
  #allocation0 [shape = 's32[1]{0}', space=sflag, size = 0x4, scoped, tag = 'scoped memory for tile.23']
  %s0 = inlined_call_operand.vmem [shape: f32[10], index: 0, kind: input, shape index: {}]
  %s1 = inlined_call_operand.vmem [shape: f32[12,10], index: 1, kind: output, shape index: {}]
  // Predicated region
  $region2: #{tile.23} parent=0 // pred_check
    _
  $region3: #{tile.23} parent=0 // pred_check_branch
    %3 = sbr.rel (0) target = $region5
  $region4: #{tile.23} parent=0 // pred_region
    _
  $region5: #{tile.23} parent=0 // pred_fallthru
    _
  %v4 = vld [vmem:[%s0] ss:$0 sm:$0xff]
  %5 = vst [vmem:[%s1] sm:$0xff] %v4
  %s6 = scalar_lea.vmem %s1, 8
  %7 = vst [vmem:[%s6] sm:$0xff] %v4

// kernel: tile.24
$region0: #{tile.24}
  %s0 = inlined_call_operand.vmem [shape: f32[12,10], index: 0, kind: input, shape index: {}]
  %s1 = inlined_call_operand.vmem [shape: f32[120], index: 1, kind: output, shape index: {}]
  $region1: #{tile.24} parent=0
    #allocation0 [shape = 'u8[4096]{0}', space=vmem, size = 0x1000, scoped, tag = 'scoped mem for output reshape']
    %v2 = vld [vmem:[%s0] sm:$0x1]
    %vm3 = vcmask 80896
    %4 = vst.msk [vmem:[#allocation0] sm:$0x1] %vm3, %v2
    %s5 = scalar_lea.vmem %s0, 11
    %v6 = vld [vmem:[%s5] sm:$0x1]
    %7 = vrot.lane.b32.xlu0 %v6, 110
    %v8 = vpop.permute.xlu0 %7
    %vm9 = vcmask 982896
    %10 = vst.msk [vmem:[#allocation0] sm:$0x1] %vm9, %v8
    %s11 = scalar_lea.vmem %s0, 10
    %v12 = vld [vmem:[%s11] sm:$0x1]
    %13 = vrot.lane.b32.xlu0 %v12, 100
    %v14 = vpop.permute.xlu0 %13
    %vm15 = vcmask 900896
    %16 = vst.msk [vmem:[#allocation0] sm:$0x1] %vm15, %v14
    %s17 = scalar_lea.vmem %s0, 9
    %v18 = vld [vmem:[%s17] sm:$0x1]
    %19 = vrot.lane.b32.xlu0 %v18, 90
    %v20 = vpop.permute.xlu0 %19
    %vm21 = vcmask 818896
    %22 = vst.msk [vmem:[#allocation0] sm:$0x1] %vm21, %v20
    %s23 = scalar_lea.vmem %s0, 8
    %v24 = vld [vmem:[%s23] sm:$0x1]
    %25 = vrot.lane.b32.xlu0 %v24, 80
    %v26 = vpop.permute.xlu0 %25
    %vm27 = vcmask 736896
    %28 = vst.msk [vmem:[#allocation0] sm:$0x1] %vm27, %v26
    %s29 = scalar_lea.vmem %s0, 7
    %v30 = vld [vmem:[%s29] sm:$0x1]
    %31 = vrot.lane.b32.xlu0 %v30, 70
    %v32 = vpop.permute.xlu0 %31
    %vm33 = vcmask 654896
    %34 = vst.msk [vmem:[#allocation0] sm:$0x1] %vm33, %v32
    %s35 = scalar_lea.vmem %s0, 6
    %v36 = vld [vmem:[%s35] sm:$0x1]
    %37 = vrot.lane.b32.xlu0 %v36, 60
    %v38 = vpop.permute.xlu0 %37
    %vm39 = vcmask 572896
    %40 = vst.msk [vmem:[#allocation0] sm:$0x1] %vm39, %v38
    %s41 = scalar_lea.vmem %s0, 5
    %v42 = vld [vmem:[%s41] sm:$0x1]
    %43 = vrot.lane.b32.xlu0 %v42, 50
    %v44 = vpop.permute.xlu0 %43
    %vm45 = vcmask 490896
    %46 = vst.msk [vmem:[#allocation0] sm:$0x1] %vm45, %v44
    %s47 = scalar_lea.vmem %s0, 4
    %v48 = vld [vmem:[%s47] sm:$0x1]
    %49 = vrot.lane.b32.xlu0 %v48, 40
    %v50 = vpop.permute.xlu0 %49
    %vm51 = vcmask 408896
    %52 = vst.msk [vmem:[#allocation0] sm:$0x1] %vm51, %v50
    %s53 = scalar_lea.vmem %s0, 3
    %v54 = vld [vmem:[%s53] sm:$0x1]
    %55 = vrot.lane.b32.xlu0 %v54, 30
    %v56 = vpop.permute.xlu0 %55
    %vm57 = vcmask 326896
    %58 = vst.msk [vmem:[#allocation0] sm:$0x1] %vm57, %v56
    %s59 = scalar_lea.vmem %s0, 2
    %v60 = vld [vmem:[%s59] sm:$0x1]
    %61 = vrot.lane.b32.xlu0 %v60, 20
    %v62 = vpop.permute.xlu0 %61
    %vm63 = vcmask 244896
    %64 = vst.msk [vmem:[#allocation0] sm:$0x1] %vm63, %v62
    %s65 = scalar_lea.vmem %s0, 1
    %v66 = vld [vmem:[%s65] sm:$0x1]
    %67 = vrot.lane.b32.xlu0 %v66, 10
    %v68 = vpop.permute.xlu0 %67
    %vm69 = vcmask 162896
    %70 = vst.msk [vmem:[#allocation0] sm:$0x1] %vm69, %v68
    %s72 = ssub.s32 2, 1
    %v73 = vld [vmem:[#allocation0] sm:%s72]
    %s75 = ssub.s32 2, 1
    %76 = vst [vmem:[%s1] sm:%s75] %v73

// kernel: tile.28
$region0: #{tile.28}
  #allocation0 [shape = 's32[1]{0}', space=sflag, size = 0x4, scoped, tag = 'scoped memory for tile.28']
  %s0 = inlined_call_operand.vmem [shape: f32[128], index: 0, kind: input, shape index: {}]
  %s1 = inlined_call_operand.vmem [shape: f32[4,128], index: 1, kind: output, shape index: {}]
  // Predicated region
  $region2: #{tile.28} parent=0 // pred_check
    _
  $region3: #{tile.28} parent=0 // pred_check_branch
    %3 = sbr.rel (0) target = $region5
  $region4: #{tile.28} parent=0 // pred_region
    _
  $region5: #{tile.28} parent=0 // pred_fallthru
    _
  %v4 = vld [vmem:[%s0] ss:$0 sm:$0xff]
  %5 = vst [vmem:[%s1] sm:$0xf] %v4

// kernel: tile.34
$region0: #{tile.34}
  %s0 = inlined_call_operand.vmem [shape: f32[4,20], index: 0, kind: input, shape index: {}]
  %s1 = inlined_call_operand.vmem [shape: f32[80], index: 1, kind: output, shape index: {}]
  $region1: #{tile.34} parent=0
    #allocation0 [shape = 'u8[4096]{0}', space=vmem, size = 0x1000, scoped, tag = 'scoped mem for output reshape']
    #allocation1 [shape = 'u8[4096]{0}', space=vmem, size = 0x1000, scoped, tag = 'scoped mem for input reshape']
    %s3 = ssub.s32 16, 1
    %v4 = vld [vmem:[%s0] sm:%s3]
    %5 = vst [vmem:[#allocation1] sm:%s3] %v4
    %v6 = vld [vmem:[#allocation1] sm:$0x1]
    %vm7 = vcmask 162816
    %8 = vst.msk [vmem:[#allocation0] sm:$0x1] %vm7, %v6
    %s9 = scalar_lea.vmem [#allocation1], 3
    %v10 = vld [vmem:[%s9] sm:$0x1]
    %11 = vrot.lane.b32.xlu0 %v10, 60
    %v12 = vpop.permute.xlu0 %11
    %vm13 = vcmask 654816
    %14 = vst.msk [vmem:[#allocation0] sm:$0x1] %vm13, %v12
    %s15 = scalar_lea.vmem [#allocation1], 2
    %v16 = vld [vmem:[%s15] sm:$0x1]
    %17 = vrot.lane.b32.xlu0 %v16, 40
    %v18 = vpop.permute.xlu0 %17
    %vm19 = vcmask 490816
    %20 = vst.msk [vmem:[#allocation0] sm:$0x1] %vm19, %v18
    %s21 = scalar_lea.vmem [#allocation1], 1
    %v22 = vld [vmem:[%s21] sm:$0x1]
    %23 = vrot.lane.b32.xlu0 %v22, 20
    %v24 = vpop.permute.xlu0 %23
    %vm25 = vcmask 326816
    %26 = vst.msk [vmem:[#allocation0] sm:$0x1] %vm25, %v24
    %s28 = ssub.s32 2, 1
    %v29 = vld [vmem:[#allocation0] sm:%s28]
    %s31 = ssub.s32 2, 1
    %32 = vst [vmem:[%s1] sm:%s31] %v29

// kernel: tile.33
$region0: #{tile.33}
  #allocation0 [shape = 's32[1]{0}', space=sflag, size = 0x4, scoped, tag = 'scoped memory for tile.33']
  %s0 = inlined_call_operand.vmem [shape: f32[20], index: 0, kind: input, shape index: {}]
  %s1 = inlined_call_operand.vmem [shape: f32[4,20], index: 1, kind: output, shape index: {}]
  // Predicated region
  $region2: #{tile.33} parent=0 // pred_check
    _
  $region3: #{tile.33} parent=0 // pred_check_branch
    %3 = sbr.rel (0) target = $region5
  $region4: #{tile.33} parent=0 // pred_region
    _
  $region5: #{tile.33} parent=0 // pred_fallthru
    _
  %v4 = vld [vmem:[%s0] ss:$0 sm:$0xff]
  %5 = vst [vmem:[%s1] sm:$0xf] %v4

// kernel: tile.38
$region0: #{tile.38}
  #allocation0 [shape = 's32[1]{0}', space=sflag, size = 0x4, scoped, tag = 'scoped memory for tile.38']
  %s0 = inlined_call_operand.vmem [shape: f32[128], index: 0, kind: input, shape index: {}]
  %s1 = inlined_call_operand.vmem [shape: f32[2,128], index: 1, kind: output, shape index: {}]
  // Predicated region
  $region2: #{tile.38} parent=0 // pred_check
    _
  $region3: #{tile.38} parent=0 // pred_check_branch
    %3 = sbr.rel (0) target = $region5
  $region4: #{tile.38} parent=0 // pred_region
    _
  $region5: #{tile.38} parent=0 // pred_fallthru
    _
  %v4 = vld [vmem:[%s0] ss:$0 sm:$0xff]
  %5 = vst [vmem:[%s1] sm:$0x3] %v4

// kernel: mnist_convnet_forward.1
$region0: #{mnist_convnet_forward.1}
  #allocation0 [shape = 'u32[]', space=smem, size = 0x4, offset = 0x4, fixed_abs, tag = 'smem constant byte address 0x4 - core index']
  #allocation1 [shape = 'u32[72,128]{1,0:T(1,128)}', space=vmem, size = 0x9000, scoped, tag = 'internal scratch']
  #allocation2 [shape = 'bf16[112,128]{1,0:T(8,128)(2,1)}', space=vmem, size = 0x7000, scoped, tag = 'scratch operand']
  #allocation3 [shape = 'f32[112,128]{1,0:T(8,128)}', space=vmem, size = 0xe000, scoped, tag = 'scratch operand']
  %s0 = inlined_call_operand.vmem [shape: bf16[112,56], index: 0, kind: input, shape index: {}]
  %s1 = inlined_call_operand.vmem [shape: bf16[168,512], index: 1, kind: input, shape index: {}]
  %s2 = inlined_call_operand.vmem [shape: f32[1,512], index: 2, kind: input, shape index: {}]
  %s3 = inlined_call_operand.vmem [shape: bf16[640,256], index: 3, kind: input, shape index: {}]
  %s4 = inlined_call_operand.vmem [shape: f32[1,256], index: 4, kind: input, shape index: {}]
  %s5 = inlined_call_operand.vmem [shape: bf16[512,64], index: 5, kind: input, shape index: {}]
  %s6 = inlined_call_operand.vmem [shape: f32[1,64], index: 6, kind: input, shape index: {}]
  %s7 = inlined_call_operand.vmem [shape: bf16[64,128], index: 7, kind: input, shape index: {}]
  %s8 = inlined_call_operand.vmem [shape: f32[1,128], index: 8, kind: input, shape index: {}]
  %s9 = inlined_call_operand.vmem [shape: f32[8,128], index: 9, kind: output, shape index: {}]
  %s10 = sld [smem:[#allocation0]]
  $region46: #{mnist_convnet_forward.1} parent=0
    _
  %s12 = ssub.s32 1, %s10
  %s13 = scalar_select 0, %s12, %s10
  // Predicated region
  $region2: #{mnist_convnet_forward.1} parent=0 // pred_check
    _
  $region3: #{mnist_convnet_forward.1} parent=0 // pred_check_branch
    %15 = sbr.rel (0) target = $region5
  $region4: #{mnist_convnet_forward.1} parent=0 // pred_region
    _
  $region5: #{mnist_convnet_forward.1} parent=0 // pred_fallthru
    _
  // Predicated region
  $region6: #{mnist_convnet_forward.1} parent=0 // pred_check
    _
  $region7: #{mnist_convnet_forward.1} parent=0 // pred_check_branch
    %17 = sbr.rel (0) target = $region9
  $region8: #{mnist_convnet_forward.1} parent=0 // pred_region
    _
  $region9: #{mnist_convnet_forward.1} parent=0 // pred_fallthru
    _
  // Predicated region
  $region10: #{mnist_convnet_forward.1} parent=0 // pred_check
    _
  $region11: #{mnist_convnet_forward.1} parent=0 // pred_check_branch
    %19 = sbr.rel (0) target = $region13
  $region12: #{mnist_convnet_forward.1} parent=0 // pred_region
    _
  $region13: #{mnist_convnet_forward.1} parent=0 // pred_fallthru
    _
  // Predicated region
  $region14: #{mnist_convnet_forward.1} parent=0 // pred_check
    _
  $region15: #{mnist_convnet_forward.1} parent=0 // pred_check_branch
    %21 = sbr.rel (0) target = $region17
  $region16: #{mnist_convnet_forward.1} parent=0 // pred_region
    _
  $region17: #{mnist_convnet_forward.1} parent=0 // pred_fallthru
    _
  // Predicated region
  $region18: #{mnist_convnet_forward.1} parent=0 // pred_check
    _
  $region19: #{mnist_convnet_forward.1} parent=0 // pred_check_branch
    %23 = sbr.rel (0) target = $region21
  $region20: #{mnist_convnet_forward.1} parent=0 // pred_region
    _
  $region21: #{mnist_convnet_forward.1} parent=0 // pred_fallthru
    _
  // Predicated region
  $region22: #{mnist_convnet_forward.1} parent=0 // pred_check
    _
  $region23: #{mnist_convnet_forward.1} parent=0 // pred_check_branch
    %25 = sbr.rel (0) target = $region25
  $region24: #{mnist_convnet_forward.1} parent=0 // pred_region
    _
  $region25: #{mnist_convnet_forward.1} parent=0 // pred_fallthru
    _
  // Predicated region
  $region26: #{mnist_convnet_forward.1} parent=0 // pred_check
    _
  $region27: #{mnist_convnet_forward.1} parent=0 // pred_check_branch
    %27 = sbr.rel (0) target = $region29
  $region28: #{mnist_convnet_forward.1} parent=0 // pred_region
    _
  $region29: #{mnist_convnet_forward.1} parent=0 // pred_fallthru
    _
  // Predicated region
  $region30: #{mnist_convnet_forward.1} parent=0 // pred_check
    _
  $region31: #{mnist_convnet_forward.1} parent=0 // pred_check_branch
    %29 = sbr.rel (0) target = $region33
  $region32: #{mnist_convnet_forward.1} parent=0 // pred_region
    _
  $region33: #{mnist_convnet_forward.1} parent=0 // pred_fallthru
    _
  // Predicated region
  $region34: #{mnist_convnet_forward.1} parent=0 // pred_check
    _
  $region35: #{mnist_convnet_forward.1} parent=0 // pred_check_branch
    %31 = sbr.rel (0) target = $region37
  $region36: #{mnist_convnet_forward.1} parent=0 // pred_region
    _
  $region37: #{mnist_convnet_forward.1} parent=0 // pred_fallthru
    _
  %v33 = vld [vmem:[%s0] sm:$0xf]
  %v34 = vld [vmem:[%s0 + $0x4] sm:$0xf]
  %v35 = vld [vmem:[%s0 + $0x8] sm:$0xf]
  %v36 = vld [vmem:[%s0 + $0xc] sm:$0xf]
  %v37 = vld [vmem:[%s0 + $0x10] sm:$0xf]
  %v38 = vld [vmem:[%s0 + $0x14] sm:$0xf]
  %v39 = vld [vmem:[%s0 + $0x18] sm:$0xf]
  %v40 = vld [vmem:[%s0 + $0x1c] sm:$0xf]
  %v41 = vld [vmem:[%s0 + $0x20] sm:$0xf]
  %v42 = vld [vmem:[%s0 + $0x24] sm:$0xf]
  %v43 = vld [vmem:[%s0 + $0x28] sm:$0xf]
  %v44 = vld [vmem:[%s0 + $0x2c] sm:$0xf]
  %v45 = vld [vmem:[%s0 + $0x30] sm:$0xf]
  %v46 = vld [vmem:[%s0 + $0x34] sm:$0x7]
  %v47 = vld [vmem:[%s0 + $0x34] sm:$0xf]
  %v48 = vld [vmem:[%s0] sm:$0xe]
  %v63 = vunpack.c.l.b16 %v33
  %v64 = vunpack.c.l.b16 %v34
  %v65 = vunpack.c.l.b16 %v35
  %v66 = vunpack.c.l.b16 %v36
  %v67 = vunpack.c.l.b16 %v37
  %v68 = vunpack.c.l.b16 %v38
  %v69 = vunpack.c.l.b16 %v39
  %v70 = vunpack.c.l.b16 %v40
  %v71 = vunpack.c.l.b16 %v41
  %v72 = vunpack.c.l.b16 %v42
  %v73 = vunpack.c.l.b16 %v43
  %v74 = vunpack.c.l.b16 %v44
  %v75 = vunpack.c.l.b16 %v45
  %v76 = vunpack.c.l.b16 %v46
  %v77 = vpack.c.b16 %v64, %v63
  %v78 = vpack.c.b16 %v66, %v65
  %v79 = vpack.c.b16 %v68, %v67
  %v80 = vpack.c.b16 %v70, %v69
  %v81 = vpack.c.b16 %v72, %v71
  %v82 = vpack.c.b16 %v74, %v73
  %v83 = vpack.c.b16 %v76, %v75
  %v85 = vunpack.c.l.b16 %v47
  %v86 = vpack.c.b16 %v85, %v75
  %vm87 = vsmask.f32 7424
  %v89 = vshrl.u32 %v77, 16
  %v91 = vshll.u32 %v77, 16
  %v93 = vrot.slane %v91, 1
  %v94 = vor.u32 %v89, %v93
  %v96 = vshll.u32 %v78, 16
  %v98 = vrot.slane %v96, 1
  %v99 = vsel %vm87, %v94, %v98
  %v100 = vshrl.u32 %v78, 16
  %v102 = vor.u32 %v100, %v98
  %v104 = vshll.u32 %v79, 16
  %v106 = vrot.slane %v104, 1
  %v107 = vsel %vm87, %v102, %v106
  %v108 = vshrl.u32 %v79, 16
  %v110 = vor.u32 %v108, %v106
  %v112 = vshll.u32 %v80, 16
  %v114 = vrot.slane %v112, 1
  %v115 = vsel %vm87, %v110, %v114
  %v116 = vshrl.u32 %v80, 16
  %v118 = vor.u32 %v116, %v114
  %v120 = vshll.u32 %v81, 16
  %v122 = vrot.slane %v120, 1
  %v123 = vsel %vm87, %v118, %v122
  %v124 = vshrl.u32 %v81, 16
  %v126 = vor.u32 %v124, %v122
  %v128 = vshll.u32 %v82, 16
  %v130 = vrot.slane %v128, 1
  %v131 = vsel %vm87, %v126, %v130
  %v132 = vshrl.u32 %v82, 16
  %v134 = vor.u32 %v132, %v130
  %v136 = vshll.u32 %v86, 16
  %v138 = vrot.slane %v136, 1
  %v139 = vsel %vm87, %v134, %v138
  %v140 = vshrl.u32 %v86, 16
  %v142 = vor.u32 %v140, %v138
  %143 = vrot.lane.b32.xlu0 %v99, 56
  %v144 = vpop.permute.xlu0 %143
  %145 = vrot.lane.b32.xlu0 %v107, 56
  %v146 = vpop.permute.xlu0 %145
  %147 = vrot.lane.b32.xlu0 %v115, 56
  %v148 = vpop.permute.xlu0 %147
  %149 = vrot.lane.b32.xlu0 %v123, 56
  %v150 = vpop.permute.xlu0 %149
  %151 = vrot.lane.b32.xlu0 %v131, 56
  %v152 = vpop.permute.xlu0 %151
  %153 = vrot.lane.b32.xlu0 %v139, 56
  %v154 = vpop.permute.xlu0 %153
  %155 = vrot.lane.b32.xlu0 %v142, 56
  %v156 = vpop.permute.xlu0 %155
  %v158 = vunpack.c.l.b16 %v48
  %v159 = vpack.c.b16 %v64, %v158
  %vm160 = vcmask 1046528
  %v161 = vrot.slane %v159, 1
  %v162 = vrot.slane %v78, 1
  %v163 = vsel %vm160, %v161, %v162
  %v164 = vrot.slane %v79, 1
  %v165 = vsel %vm160, %v162, %v164
  %v166 = vrot.slane %v80, 1
  %v167 = vsel %vm160, %v164, %v166
  %v168 = vrot.slane %v81, 1
  %v169 = vsel %vm160, %v166, %v168
  %v170 = vrot.slane %v82, 1
  %v171 = vsel %vm160, %v168, %v170
  %v172 = vrot.slane %v86, 1
  %v173 = vsel %vm160, %v170, %v172
  %174 = vrot.lane.b32.xlu0 %v163, 112
  %v175 = vpop.permute.xlu0 %174
  %176 = vrot.lane.b32.xlu0 %v165, 112
  %v177 = vpop.permute.xlu0 %176
  %178 = vrot.lane.b32.xlu0 %v167, 112
  %v179 = vpop.permute.xlu0 %178
  %180 = vrot.lane.b32.xlu0 %v169, 112
  %v181 = vpop.permute.xlu0 %180
  %182 = vrot.lane.b32.xlu0 %v171, 112
  %v183 = vpop.permute.xlu0 %182
  %184 = vrot.lane.b32.xlu0 %v173, 112
  %v185 = vpop.permute.xlu0 %184
  %186 = vrot.lane.b32.xlu0 %v172, 112
  %v187 = vpop.permute.xlu0 %186
  %vm188 = vcmask 457728
  %v190 = vsel %vm188, %v77, %v144
  %v192 = vsel %vm188, %v78, %v146
  %v194 = vsel %vm188, %v79, %v148
  %v196 = vsel %vm188, %v80, %v150
  %v198 = vsel %vm188, %v81, %v152
  %v200 = vsel %vm188, %v82, %v154
  %v203 = vsel %vm188, %v83, %v156
  %vm204 = vcmask 916480
  %v206 = vsel %vm204, %v190, %v175
  %v209 = vsel %vm204, %v192, %v177
  %v212 = vsel %vm204, %v194, %v179
  %v215 = vsel %vm204, %v196, %v181
  %v218 = vsel %vm204, %v198, %v183
  %v221 = vsel %vm204, %v200, %v185
  %v224 = vsel %vm204, %v203, %v187
  %v226 = vld [vmem:[%s1] sm:$0xff]
  %v227 = vld [vmem:[%s1 + $0x8] sm:$0xff]
  %v228 = vld [vmem:[%s1 + $0x10] sm:$0xff]
  %v229 = vld [vmem:[%s1 + $0x18] sm:$0xff]
  %v230 = vld [vmem:[%s1 + $0x20] sm:$0xff]
  %v231 = vld [vmem:[%s1 + $0x28] sm:$0xff]
  %v232 = vld [vmem:[%s1 + $0x30] sm:$0xff]
  %v233 = vld [vmem:[%s1 + $0x38] sm:$0xff]
  %v234 = vld [vmem:[%s1 + $0x40] sm:$0xff]
  %v235 = vld [vmem:[%s1 + $0x48] sm:$0xff]
  %v236 = vld [vmem:[%s1 + $0x50] sm:$0xff]
  %v237 = vld [vmem:[%s1 + $0x58] sm:$0xff]
  %v238 = vld [vmem:[%s1 + $0x60] sm:$0xff]
  %v239 = vld [vmem:[%s1 + $0x68] sm:$0xff]
  %v240 = vld [vmem:[%s1 + $0x70] sm:$0xff]
  %v241 = vld [vmem:[%s1 + $0x78] sm:$0xff]
  %v242 = vld [vmem:[%s1 + $0x80] sm:$0xff]
  %v243 = vld [vmem:[%s1 + $0x88] sm:$0xff]
  %v244 = vld [vmem:[%s1 + $0x90] sm:$0xff]
  %v245 = vld [vmem:[%s1 + $0x98] sm:$0xff]
  %v246 = vld [vmem:[%s1 + $0xa0] sm:$0xff]
  %v247 = vld [vmem:[%s1 + $0xa8] sm:$0xff]
  %v248 = vld [vmem:[%s1 + $0xb0] sm:$0xff]
  %v249 = vld [vmem:[%s1 + $0xb8] sm:$0xff]
  %v250 = vld [vmem:[%s1 + $0xc0] sm:$0xff]
  %v251 = vld [vmem:[%s1 + $0xc8] sm:$0xff]
  %v252 = vld [vmem:[%s1 + $0xd0] sm:$0xff]
  %v253 = vld [vmem:[%s1 + $0xd8] sm:$0xff]
  %v254 = vld [vmem:[%s1 + $0xe0] sm:$0xff]
  %v255 = vld [vmem:[%s1 + $0xe8] sm:$0xff]
  %v256 = vld [vmem:[%s1 + $0xf0] sm:$0xff]
  %v257 = vld [vmem:[%s1 + $0xf8] sm:$0xff]
  %v258 = vld [vmem:[%s1 + $0x100] sm:$0xff]
  %v259 = vld [vmem:[%s1 + $0x108] sm:$0xff]
  %v260 = vld [vmem:[%s1 + $0x110] sm:$0xff]
  %v261 = vld [vmem:[%s1 + $0x118] sm:$0xff]
  %v262 = vld [vmem:[%s1 + $0x120] sm:$0xff]
  %v263 = vld [vmem:[%s1 + $0x128] sm:$0xff]
  %v264 = vld [vmem:[%s1 + $0x130] sm:$0xff]
  %v265 = vld [vmem:[%s1 + $0x138] sm:$0xff]
  %v266 = vld [vmem:[%s1 + $0x140] sm:$0xff]
  %v267 = vld [vmem:[%s1 + $0x148] sm:$0xff]
  %v268 = vld [vmem:[%s2] sm:$0xf]
  %v270 = vperm.slane %v268, 0
  %v271 = vperm.slane %v268, 1
  %v272 = vperm.slane %v268, 2
  %v273 = vperm.slane %v268, 3
  %v320 = vunpack.c.l.b16 %v226
  %v321 = vunpack.c.h.b16 %v226
  %v322 = vunpack.c.l.b16 %v227
  %v323 = vunpack.c.h.b16 %v227
  %v324 = vunpack.c.l.b16 %v228
  %v325 = vunpack.c.h.b16 %v228
  %v326 = vunpack.c.l.b16 %v229
  %v327 = vunpack.c.h.b16 %v229
  %v328 = vunpack.c.l.b16 %v230
  %v329 = vunpack.c.h.b16 %v230
  %v330 = vunpack.c.l.b16 %v231
  %v331 = vunpack.c.h.b16 %v231
  %v332 = vunpack.c.l.b16 %v232
  %v333 = vunpack.c.h.b16 %v232
  %v334 = vunpack.c.l.b16 %v233
  %v335 = vunpack.c.h.b16 %v233
  %v336 = vunpack.c.l.b16 %v234
  %v337 = vunpack.c.h.b16 %v234
  %v338 = vunpack.c.l.b16 %v235
  %v339 = vunpack.c.h.b16 %v235
  %v340 = vunpack.c.l.b16 %v236
  %v341 = vunpack.c.h.b16 %v236
  %v342 = vunpack.c.l.b16 %v237
  %v343 = vunpack.c.h.b16 %v237
  %v344 = vunpack.c.l.b16 %v238
  %v345 = vunpack.c.h.b16 %v238
  %v346 = vunpack.c.l.b16 %v239
  %v347 = vunpack.c.h.b16 %v239
  %v348 = vunpack.c.l.b16 %v240
  %v349 = vunpack.c.h.b16 %v240
  %v350 = vunpack.c.l.b16 %v241
  %v351 = vunpack.c.h.b16 %v241
  %v352 = vunpack.c.l.b16 %v242
  %v353 = vunpack.c.h.b16 %v242
  %v354 = vunpack.c.l.b16 %v243
  %v355 = vunpack.c.h.b16 %v243
  %v356 = vunpack.c.l.b16 %v244
  %v357 = vunpack.c.h.b16 %v244
  %v358 = vunpack.c.l.b16 %v245
  %v359 = vunpack.c.h.b16 %v245
  %v360 = vunpack.c.l.b16 %v246
  %v361 = vunpack.c.h.b16 %v246
  %v362 = vunpack.c.l.b16 %v247
  %v363 = vunpack.c.h.b16 %v247
  %v364 = vunpack.c.l.b16 %v248
  %v365 = vunpack.c.h.b16 %v248
  %v366 = vunpack.c.l.b16 %v249
  %v367 = vunpack.c.h.b16 %v249
  %v368 = vunpack.c.l.b16 %v250
  %v369 = vunpack.c.h.b16 %v250
  %v370 = vunpack.c.l.b16 %v251
  %v371 = vunpack.c.h.b16 %v251
  %v372 = vunpack.c.l.b16 %v252
  %v373 = vunpack.c.h.b16 %v252
  %v374 = vunpack.c.l.b16 %v253
  %v375 = vunpack.c.h.b16 %v253
  %v376 = vunpack.c.l.b16 %v254
  %v377 = vunpack.c.h.b16 %v254
  %v378 = vunpack.c.l.b16 %v255
  %v379 = vunpack.c.h.b16 %v255
  %v380 = vunpack.c.l.b16 %v256
  %v381 = vunpack.c.h.b16 %v256
  %v382 = vunpack.c.l.b16 %v257
  %v383 = vunpack.c.h.b16 %v257
  %v384 = vunpack.c.l.b16 %v258
  %v385 = vunpack.c.h.b16 %v258
  %v386 = vunpack.c.l.b16 %v259
  %v387 = vunpack.c.h.b16 %v259
  %v388 = vunpack.c.l.b16 %v260
  %v389 = vunpack.c.h.b16 %v260
  %v390 = vunpack.c.l.b16 %v261
  %v391 = vunpack.c.h.b16 %v261
  %v392 = vunpack.c.l.b16 %v262
  %v393 = vunpack.c.h.b16 %v262
  %v394 = vunpack.c.l.b16 %v263
  %v395 = vunpack.c.h.b16 %v263
  %v396 = vunpack.c.l.b16 %v264
  %v397 = vunpack.c.h.b16 %v264
  %v398 = vunpack.c.l.b16 %v265
  %v399 = vunpack.c.h.b16 %v265
  %v400 = vunpack.c.l.b16 %v266
  %v401 = vunpack.c.h.b16 %v266
  %v402 = vunpack.c.l.b16 %v267
  %v403 = vunpack.c.h.b16 %v267
  %v404 = vpack.c.b16 %v324, %v320
  %v405 = vpack.c.b16 %v325, %v321
  %v406 = vpack.c.b16 %v326, %v322
  %v407 = vpack.c.b16 %v327, %v323
  %v408 = vpack.c.b16 %v332, %v328
  %v409 = vpack.c.b16 %v333, %v329
  %v410 = vpack.c.b16 %v334, %v330
  %v411 = vpack.c.b16 %v335, %v331
  %v412 = vpack.c.b16 %v340, %v336
  %v413 = vpack.c.b16 %v341, %v337
  %v414 = vpack.c.b16 %v342, %v338
  %v415 = vpack.c.b16 %v343, %v339
  %v416 = vpack.c.b16 %v348, %v344
  %v417 = vpack.c.b16 %v349, %v345
  %v418 = vpack.c.b16 %v350, %v346
  %v419 = vpack.c.b16 %v351, %v347
  %v420 = vpack.c.b16 %v356, %v352
  %v421 = vpack.c.b16 %v357, %v353
  %v422 = vpack.c.b16 %v358, %v354
  %v423 = vpack.c.b16 %v359, %v355
  %v424 = vpack.c.b16 %v364, %v360
  %v425 = vpack.c.b16 %v365, %v361
  %v426 = vpack.c.b16 %v366, %v362
  %v427 = vpack.c.b16 %v367, %v363
  %v428 = vpack.c.b16 %v372, %v368
  %v429 = vpack.c.b16 %v373, %v369
  %v430 = vpack.c.b16 %v374, %v370
  %v431 = vpack.c.b16 %v375, %v371
  %v432 = vpack.c.b16 %v380, %v376
  %v433 = vpack.c.b16 %v381, %v377
  %v434 = vpack.c.b16 %v382, %v378
  %v435 = vpack.c.b16 %v383, %v379
  %v436 = vpack.c.b16 %v388, %v384
  %v437 = vpack.c.b16 %v389, %v385
  %v438 = vpack.c.b16 %v390, %v386
  %v439 = vpack.c.b16 %v391, %v387
  %v440 = vpack.c.b16 %v396, %v392
  %v441 = vpack.c.b16 %v397, %v393
  %v442 = vpack.c.b16 %v398, %v394
  %v443 = vpack.c.b16 %v399, %v395
  %v444 = vpack.c.b16 %v400, %v400
  %v445 = vpack.c.b16 %v401, %v401
  %v446 = vpack.c.b16 %v402, %v402
  %v447 = vpack.c.b16 %v403, %v403
  %vm488 = vcmask 326656
  %v489 = vsel %vm488, %v175, 0
  %v491 = vsel %vm488, %v177, 0
  %v493 = vsel %vm488, %v179, 0
  %v495 = vsel %vm488, %v181, 0
  %v497 = vsel %vm488, %v183, 0
  %v499 = vsel %vm488, %v185, 0
  %v501 = vsel %vm488, %v187, 0
  %vm503 = vcmask 1043456
  %v505 = vsel %vm503, %v444, 0
  %v508 = vsel %vm503, %v445, 0
  %v511 = vsel %vm503, %v446, 0
  %v514 = vsel %vm503, %v447, 0
  %516 = vmatpush.bf16.msra.mxu0 %v432
  %517 = vmatpush.bf16.msra.mxu0 %v428
  %518 = vmatpush.bf16.msra.mxu0 %v424
  %519 = vmatpush.bf16.msra.mxu0 %v420
  %520 = vmatpush.bf16.msra.mxu0 %v416
  %521 = vmatpush.bf16.msra.mxu0 %v412
  %522 = vmatpush.bf16.msra.mxu0 %v408
  %523 = vmatpush.bf16.msra.mxu0 %v404
  %524 = vmatmul.bf16.gmra.mxu0 %v206
  %v525 = vpop.f32.mrf.mxu0
  %v526 = vadd.f32 %v270, %v525
  %v527 = vpop.f32.mrf.mxu0
  %v528 = vadd.f32 %v270, %v527
  %529 = vmatmul.bf16.gmra.mxu0 %v209
  %v530 = vpop.f32.mrf.mxu0
  %v531 = vadd.f32 %v270, %v530
  %v532 = vpop.f32.mrf.mxu0
  %v533 = vadd.f32 %v270, %v532
  %534 = vmatmul.bf16.gmra.mxu0 %v212
  %v535 = vpop.f32.mrf.mxu0
  %v536 = vadd.f32 %v270, %v535
  %v537 = vpop.f32.mrf.mxu0
  %v538 = vadd.f32 %v270, %v537
  %539 = vmatmul.bf16.gmra.mxu0 %v215
  %v540 = vpop.f32.mrf.mxu0
  %v541 = vadd.f32 %v270, %v540
  %v542 = vpop.f32.mrf.mxu0
  %v543 = vadd.f32 %v270, %v542
  %544 = vmatmul.bf16.gmra.mxu0 %v218
  %v545 = vpop.f32.mrf.mxu0
  %v546 = vadd.f32 %v270, %v545
  %v547 = vpop.f32.mrf.mxu0
  %v548 = vadd.f32 %v270, %v547
  %549 = vmatmul.bf16.gmra.mxu0 %v221
  %v550 = vpop.f32.mrf.mxu0
  %v551 = vadd.f32 %v270, %v550
  %v552 = vpop.f32.mrf.mxu0
  %v553 = vadd.f32 %v270, %v552
  %554 = vmatmul.bf16.gmra.mxu0 %v224
  %v555 = vpop.f32.mrf.mxu0
  %v556 = vadd.f32 %v270, %v555
  %v557 = vpop.f32.mrf.mxu0
  %v558 = vadd.f32 %v270, %v557
  %559 = vdwg.mxu0
  %560 = vmatpush.bf16.msra.mxu0 0
  %561 = vmatpush.bf16.msra.mxu0 0
  %562 = vmatpush.bf16.msra.mxu0 0
  %563 = vmatpush.bf16.msra.mxu0 0
  %564 = vmatpush.bf16.msra.mxu0 0
  %565 = vmatpush.bf16.msra.mxu0 %v505
  %566 = vmatpush.bf16.msra.mxu0 %v440
  %567 = vmatpush.bf16.msra.mxu0 %v436
  %568 = vmatmul.bf16.gmra.mxu0 %v489
  %v569 = vpop.f32.mrf.mxu0
  %v570 = vadd.f32 %v526, %v569
  %v571 = vpop.f32.mrf.mxu0
  %v572 = vadd.f32 %v528, %v571
  %573 = vmatmul.bf16.gmra.mxu0 %v491
  %v574 = vpop.f32.mrf.mxu0
  %v575 = vadd.f32 %v531, %v574
  %v576 = vpop.f32.mrf.mxu0
  %v577 = vadd.f32 %v533, %v576
  %578 = vmatmul.bf16.gmra.mxu0 %v493
  %v579 = vpop.f32.mrf.mxu0
  %v580 = vadd.f32 %v536, %v579
  %v581 = vpop.f32.mrf.mxu0
  %v582 = vadd.f32 %v538, %v581
  %583 = vmatmul.bf16.gmra.mxu0 %v495
  %v584 = vpop.f32.mrf.mxu0
  %v585 = vadd.f32 %v541, %v584
  %v586 = vpop.f32.mrf.mxu0
  %v587 = vadd.f32 %v543, %v586
  %588 = vmatmul.bf16.gmra.mxu0 %v497
  %v589 = vpop.f32.mrf.mxu0
  %v590 = vadd.f32 %v546, %v589
  %v591 = vpop.f32.mrf.mxu0
  %v592 = vadd.f32 %v548, %v591
  %593 = vmatmul.bf16.gmra.mxu0 %v499
  %v594 = vpop.f32.mrf.mxu0
  %v595 = vadd.f32 %v551, %v594
  %v596 = vpop.f32.mrf.mxu0
  %v597 = vadd.f32 %v553, %v596
  %598 = vmatmul.bf16.gmra.mxu0 %v501
  %v599 = vpop.f32.mrf.mxu0
  %v600 = vadd.f32 %v556, %v599
  %v601 = vpop.f32.mrf.mxu0
  %v602 = vadd.f32 %v558, %v601
  %603 = vdwg.mxu0
  %604 = vmatpush.bf16.msra.mxu0 %v433
  %605 = vmatpush.bf16.msra.mxu0 %v429
  %606 = vmatpush.bf16.msra.mxu0 %v425
  %607 = vmatpush.bf16.msra.mxu0 %v421
  %608 = vmatpush.bf16.msra.mxu0 %v417
  %609 = vmatpush.bf16.msra.mxu0 %v413
  %610 = vmatpush.bf16.msra.mxu0 %v409
  %611 = vmatpush.bf16.msra.mxu0 %v405
  %612 = vmatmul.bf16.gmra.mxu0 %v206
  %v613 = vpop.f32.mrf.mxu0
  %v614 = vadd.f32 %v271, %v613
  %v615 = vpop.f32.mrf.mxu0
  %v616 = vadd.f32 %v271, %v615
  %617 = vmatmul.bf16.gmra.mxu0 %v209
  %v618 = vpop.f32.mrf.mxu0
  %v619 = vadd.f32 %v271, %v618
  %v620 = vpop.f32.mrf.mxu0
  %v621 = vadd.f32 %v271, %v620
  %622 = vmatmul.bf16.gmra.mxu0 %v212
  %v623 = vpop.f32.mrf.mxu0
  %v624 = vadd.f32 %v271, %v623
  %v625 = vpop.f32.mrf.mxu0
  %v626 = vadd.f32 %v271, %v625
  %627 = vmatmul.bf16.gmra.mxu0 %v215
  %v628 = vpop.f32.mrf.mxu0
  %v629 = vadd.f32 %v271, %v628
  %v630 = vpop.f32.mrf.mxu0
  %v631 = vadd.f32 %v271, %v630
  %632 = vmatmul.bf16.gmra.mxu0 %v218
  %v633 = vpop.f32.mrf.mxu0
  %v634 = vadd.f32 %v271, %v633
  %v635 = vpop.f32.mrf.mxu0
  %v636 = vadd.f32 %v271, %v635
  %637 = vmatmul.bf16.gmra.mxu0 %v221
  %v638 = vpop.f32.mrf.mxu0
  %v639 = vadd.f32 %v271, %v638
  %v640 = vpop.f32.mrf.mxu0
  %v641 = vadd.f32 %v271, %v640
  %642 = vmatmul.bf16.gmra.mxu0 %v224
  %v643 = vpop.f32.mrf.mxu0
  %v644 = vadd.f32 %v271, %v643
  %v645 = vpop.f32.mrf.mxu0
  %v646 = vadd.f32 %v271, %v645
  %647 = vdwg.mxu0
  %648 = vmatpush.bf16.msra.mxu0 0
  %649 = vmatpush.bf16.msra.mxu0 0
  %650 = vmatpush.bf16.msra.mxu0 0
  %651 = vmatpush.bf16.msra.mxu0 0
  %652 = vmatpush.bf16.msra.mxu0 0
  %653 = vmatpush.bf16.msra.mxu0 %v508
  %654 = vmatpush.bf16.msra.mxu0 %v441
  %655 = vmatpush.bf16.msra.mxu0 %v437
  %656 = vmatmul.bf16.gmra.mxu0 %v489
  %v657 = vpop.f32.mrf.mxu0
  %v658 = vadd.f32 %v614, %v657
  %v659 = vpop.f32.mrf.mxu0
  %v660 = vadd.f32 %v616, %v659
  %661 = vmatmul.bf16.gmra.mxu0 %v491
  %v662 = vpop.f32.mrf.mxu0
  %v663 = vadd.f32 %v619, %v662
  %v664 = vpop.f32.mrf.mxu0
  %v665 = vadd.f32 %v621, %v664
  %666 = vmatmul.bf16.gmra.mxu0 %v493
  %v667 = vpop.f32.mrf.mxu0
  %v668 = vadd.f32 %v624, %v667
  %v669 = vpop.f32.mrf.mxu0
  %v670 = vadd.f32 %v626, %v669
  %671 = vmatmul.bf16.gmra.mxu0 %v495
  %v672 = vpop.f32.mrf.mxu0
  %v673 = vadd.f32 %v629, %v672
  %v674 = vpop.f32.mrf.mxu0
  %v675 = vadd.f32 %v631, %v674
  %676 = vmatmul.bf16.gmra.mxu0 %v497
  %v677 = vpop.f32.mrf.mxu0
  %v678 = vadd.f32 %v634, %v677
  %v679 = vpop.f32.mrf.mxu0
  %v680 = vadd.f32 %v636, %v679
  %681 = vmatmul.bf16.gmra.mxu0 %v499
  %v682 = vpop.f32.mrf.mxu0
  %v683 = vadd.f32 %v639, %v682
  %v684 = vpop.f32.mrf.mxu0
  %v685 = vadd.f32 %v641, %v684
  %686 = vmatmul.bf16.gmra.mxu0 %v501
  %v687 = vpop.f32.mrf.mxu0
  %v688 = vadd.f32 %v644, %v687
  %v689 = vpop.f32.mrf.mxu0
  %v690 = vadd.f32 %v646, %v689
  %691 = vdwg.mxu0
  %692 = vmatpush.bf16.msra.mxu0 %v434
  %693 = vmatpush.bf16.msra.mxu0 %v430
  %694 = vmatpush.bf16.msra.mxu0 %v426
  %695 = vmatpush.bf16.msra.mxu0 %v422
  %696 = vmatpush.bf16.msra.mxu0 %v418
  %697 = vmatpush.bf16.msra.mxu0 %v414
  %698 = vmatpush.bf16.msra.mxu0 %v410
  %699 = vmatpush.bf16.msra.mxu0 %v406
  %700 = vmatmul.bf16.gmra.mxu0 %v206
  %v701 = vpop.f32.mrf.mxu0
  %v702 = vadd.f32 %v272, %v701
  %v703 = vpop.f32.mrf.mxu0
  %v704 = vadd.f32 %v272, %v703
  %705 = vmatmul.bf16.gmra.mxu0 %v209
  %v706 = vpop.f32.mrf.mxu0
  %v707 = vadd.f32 %v272, %v706
  %v708 = vpop.f32.mrf.mxu0
  %v709 = vadd.f32 %v272, %v708
  %710 = vmatmul.bf16.gmra.mxu0 %v212
  %v711 = vpop.f32.mrf.mxu0
  %v712 = vadd.f32 %v272, %v711
  %v713 = vpop.f32.mrf.mxu0
  %v714 = vadd.f32 %v272, %v713
  %715 = vmatmul.bf16.gmra.mxu0 %v215
  %v716 = vpop.f32.mrf.mxu0
  %v717 = vadd.f32 %v272, %v716
  %v718 = vpop.f32.mrf.mxu0
  %v719 = vadd.f32 %v272, %v718
  %720 = vmatmul.bf16.gmra.mxu0 %v218
  %v721 = vpop.f32.mrf.mxu0
  %v722 = vadd.f32 %v272, %v721
  %v723 = vpop.f32.mrf.mxu0
  %v724 = vadd.f32 %v272, %v723
  %725 = vmatmul.bf16.gmra.mxu0 %v221
  %v726 = vpop.f32.mrf.mxu0
  %v727 = vadd.f32 %v272, %v726
  %v728 = vpop.f32.mrf.mxu0
  %v729 = vadd.f32 %v272, %v728
  %730 = vmatmul.bf16.gmra.mxu0 %v224
  %v731 = vpop.f32.mrf.mxu0
  %v732 = vadd.f32 %v272, %v731
  %v733 = vpop.f32.mrf.mxu0
  %v734 = vadd.f32 %v272, %v733
  %735 = vdwg.mxu0
  %736 = vmatpush.bf16.msra.mxu0 0
  %737 = vmatpush.bf16.msra.mxu0 0
  %738 = vmatpush.bf16.msra.mxu0 0
  %739 = vmatpush.bf16.msra.mxu0 0
  %740 = vmatpush.bf16.msra.mxu0 0
  %741 = vmatpush.bf16.msra.mxu0 %v511
  %742 = vmatpush.bf16.msra.mxu0 %v442
  %743 = vmatpush.bf16.msra.mxu0 %v438
  %744 = vmatmul.bf16.gmra.mxu0 %v489
  %v745 = vpop.f32.mrf.mxu0
  %v746 = vadd.f32 %v702, %v745
  %v747 = vpop.f32.mrf.mxu0
  %v748 = vadd.f32 %v704, %v747
  %749 = vmatmul.bf16.gmra.mxu0 %v491
  %v750 = vpop.f32.mrf.mxu0
  %v751 = vadd.f32 %v707, %v750
  %v752 = vpop.f32.mrf.mxu0
  %v753 = vadd.f32 %v709, %v752
  %754 = vmatmul.bf16.gmra.mxu0 %v493
  %v755 = vpop.f32.mrf.mxu0
  %v756 = vadd.f32 %v712, %v755
  %v757 = vpop.f32.mrf.mxu0
  %v758 = vadd.f32 %v714, %v757
  %759 = vmatmul.bf16.gmra.mxu0 %v495
  %v760 = vpop.f32.mrf.mxu0
  %v761 = vadd.f32 %v717, %v760
  %v762 = vpop.f32.mrf.mxu0
  %v763 = vadd.f32 %v719, %v762
  %764 = vmatmul.bf16.gmra.mxu0 %v497
  %v765 = vpop.f32.mrf.mxu0
  %v766 = vadd.f32 %v722, %v765
  %v767 = vpop.f32.mrf.mxu0
  %v768 = vadd.f32 %v724, %v767
  %769 = vmatmul.bf16.gmra.mxu0 %v499
  %v770 = vpop.f32.mrf.mxu0
  %v771 = vadd.f32 %v727, %v770
  %v772 = vpop.f32.mrf.mxu0
  %v773 = vadd.f32 %v729, %v772
  %774 = vmatmul.bf16.gmra.mxu0 %v501
  %v775 = vpop.f32.mrf.mxu0
  %v776 = vadd.f32 %v732, %v775
  %v777 = vpop.f32.mrf.mxu0
  %v778 = vadd.f32 %v734, %v777
  %779 = vdwg.mxu0
  %780 = vmatpush.bf16.msra.mxu0 %v435
  %781 = vmatpush.bf16.msra.mxu0 %v431
  %782 = vmatpush.bf16.msra.mxu0 %v427
  %783 = vmatpush.bf16.msra.mxu0 %v423
  %784 = vmatpush.bf16.msra.mxu0 %v419
  %785 = vmatpush.bf16.msra.mxu0 %v415
  %786 = vmatpush.bf16.msra.mxu0 %v411
  %787 = vmatpush.bf16.msra.mxu0 %v407
  %788 = vmatmul.bf16.gmra.mxu0 %v206
  %v789 = vpop.f32.mrf.mxu0
  %v790 = vadd.f32 %v273, %v789
  %v791 = vpop.f32.mrf.mxu0
  %v792 = vadd.f32 %v273, %v791
  %793 = vmatmul.bf16.gmra.mxu0 %v209
  %v794 = vpop.f32.mrf.mxu0
  %v795 = vadd.f32 %v273, %v794
  %v796 = vpop.f32.mrf.mxu0
  %v797 = vadd.f32 %v273, %v796
  %798 = vmatmul.bf16.gmra.mxu0 %v212
  %v799 = vpop.f32.mrf.mxu0
  %v800 = vadd.f32 %v273, %v799
  %v801 = vpop.f32.mrf.mxu0
  %v802 = vadd.f32 %v273, %v801
  %803 = vmatmul.bf16.gmra.mxu0 %v215
  %v804 = vpop.f32.mrf.mxu0
  %v805 = vadd.f32 %v273, %v804
  %v806 = vpop.f32.mrf.mxu0
  %v807 = vadd.f32 %v273, %v806
  %808 = vmatmul.bf16.gmra.mxu0 %v218
  %v809 = vpop.f32.mrf.mxu0
  %v810 = vadd.f32 %v273, %v809
  %v811 = vpop.f32.mrf.mxu0
  %v812 = vadd.f32 %v273, %v811
  %813 = vmatmul.bf16.gmra.mxu0 %v221
  %v814 = vpop.f32.mrf.mxu0
  %v815 = vadd.f32 %v273, %v814
  %v816 = vpop.f32.mrf.mxu0
  %v817 = vadd.f32 %v273, %v816
  %818 = vmatmul.bf16.gmra.mxu0 %v224
  %v819 = vpop.f32.mrf.mxu0
  %v820 = vadd.f32 %v273, %v819
  %v821 = vpop.f32.mrf.mxu0
  %v822 = vadd.f32 %v273, %v821
  %823 = vdwg.mxu0
  %824 = vmatpush.bf16.msra.mxu0 0
  %825 = vmatpush.bf16.msra.mxu0 0
  %826 = vmatpush.bf16.msra.mxu0 0
  %827 = vmatpush.bf16.msra.mxu0 0
  %828 = vmatpush.bf16.msra.mxu0 0
  %829 = vmatpush.bf16.msra.mxu0 %v514
  %830 = vmatpush.bf16.msra.mxu0 %v443
  %831 = vmatpush.bf16.msra.mxu0 %v439
  %832 = vmatmul.bf16.gmra.mxu0 %v489
  %v833 = vpop.f32.mrf.mxu0
  %v834 = vadd.f32 %v790, %v833
  %v835 = vpop.f32.mrf.mxu0
  %v836 = vadd.f32 %v792, %v835
  %837 = vmatmul.bf16.gmra.mxu0 %v491
  %v838 = vpop.f32.mrf.mxu0
  %v839 = vadd.f32 %v795, %v838
  %v840 = vpop.f32.mrf.mxu0
  %v841 = vadd.f32 %v797, %v840
  %842 = vmatmul.bf16.gmra.mxu0 %v493
  %v843 = vpop.f32.mrf.mxu0
  %v844 = vadd.f32 %v800, %v843
  %v845 = vpop.f32.mrf.mxu0
  %v846 = vadd.f32 %v802, %v845
  %847 = vmatmul.bf16.gmra.mxu0 %v495
  %v848 = vpop.f32.mrf.mxu0
  %v849 = vadd.f32 %v805, %v848
  %v850 = vpop.f32.mrf.mxu0
  %v851 = vadd.f32 %v807, %v850
  %852 = vmatmul.bf16.gmra.mxu0 %v497
  %v853 = vpop.f32.mrf.mxu0
  %v854 = vadd.f32 %v810, %v853
  %v855 = vpop.f32.mrf.mxu0
  %v856 = vadd.f32 %v812, %v855
  %857 = vmatmul.bf16.gmra.mxu0 %v499
  %v858 = vpop.f32.mrf.mxu0
  %v859 = vadd.f32 %v815, %v858
  %v860 = vpop.f32.mrf.mxu0
  %v861 = vadd.f32 %v817, %v860
  %862 = vmatmul.bf16.gmra.mxu0 %v501
  %v863 = vpop.f32.mrf.mxu0
  %v864 = vadd.f32 %v820, %v863
  %v865 = vpop.f32.mrf.mxu0
  %v866 = vadd.f32 %v822, %v865
  %867 = vdwg.mxu0
  %v868 = vmax.f32 %v570, 0.0
  %v869 = vmax.f32 %v658, 0.0
  %v870 = vmax.f32 %v746, 0.0
  %v871 = vmax.f32 %v834, 0.0
  %v872 = vmax.f32 %v572, 0.0
  %v873 = vmax.f32 %v660, 0.0
  %v874 = vmax.f32 %v748, 0.0
  %v875 = vmax.f32 %v836, 0.0
  %v876 = vmax.f32 %v575, 0.0
  %v877 = vmax.f32 %v663, 0.0
  %v878 = vmax.f32 %v751, 0.0
  %v879 = vmax.f32 %v839, 0.0
  %v880 = vmax.f32 %v577, 0.0
  %v881 = vmax.f32 %v665, 0.0
  %v882 = vmax.f32 %v753, 0.0
  %v883 = vmax.f32 %v841, 0.0
  %v884 = vmax.f32 %v580, 0.0
  %v885 = vmax.f32 %v668, 0.0
  %v886 = vmax.f32 %v756, 0.0
  %v887 = vmax.f32 %v844, 0.0
  %v888 = vmax.f32 %v582, 0.0
  %v889 = vmax.f32 %v670, 0.0
  %v890 = vmax.f32 %v758, 0.0
  %v891 = vmax.f32 %v846, 0.0
  %v892 = vmax.f32 %v585, 0.0
  %v893 = vmax.f32 %v673, 0.0
  %v894 = vmax.f32 %v761, 0.0
  %v895 = vmax.f32 %v849, 0.0
  %v896 = vmax.f32 %v587, 0.0
  %v897 = vmax.f32 %v675, 0.0
  %v898 = vmax.f32 %v763, 0.0
  %v899 = vmax.f32 %v851, 0.0
  %v900 = vmax.f32 %v590, 0.0
  %v901 = vmax.f32 %v678, 0.0
  %v902 = vmax.f32 %v766, 0.0
  %v903 = vmax.f32 %v854, 0.0
  %v904 = vmax.f32 %v592, 0.0
  %v905 = vmax.f32 %v680, 0.0
  %v906 = vmax.f32 %v768, 0.0
  %v907 = vmax.f32 %v856, 0.0
  %v908 = vmax.f32 %v595, 0.0
  %v909 = vmax.f32 %v683, 0.0
  %v910 = vmax.f32 %v771, 0.0
  %v911 = vmax.f32 %v859, 0.0
  %v912 = vmax.f32 %v597, 0.0
  %v913 = vmax.f32 %v685, 0.0
  %v914 = vmax.f32 %v773, 0.0
  %v915 = vmax.f32 %v861, 0.0
  %v916 = vmax.f32 %v600, 0.0
  %v917 = vmax.f32 %v688, 0.0
  %v918 = vmax.f32 %v776, 0.0
  %v919 = vmax.f32 %v864, 0.0
  %v920 = vmax.f32 %v602, 0.0
  %v921 = vmax.f32 %v690, 0.0
  %v922 = vmax.f32 %v778, 0.0
  %v923 = vmax.f32 %v866, 0.0
  %v924 = vmax.f32 %v868, %v869
  %v925 = vmax.f32 %v872, %v873
  %v926 = vmax.f32 %v876, %v877
  %v927 = vmax.f32 %v880, %v881
  %v928 = vmax.f32 %v884, %v885
  %v929 = vmax.f32 %v888, %v889
  %v930 = vmax.f32 %v892, %v893
  %v931 = vmax.f32 %v896, %v897
  %v932 = vmax.f32 %v900, %v901
  %v933 = vmax.f32 %v904, %v905
  %v934 = vmax.f32 %v908, %v909
  %v935 = vmax.f32 %v912, %v913
  %v936 = vmax.f32 %v916, %v917
  %v937 = vmax.f32 %v920, %v921
  %v938 = vmax.f32 %v870, %v871
  %v939 = vmax.f32 %v874, %v875
  %v940 = vmax.f32 %v878, %v879
  %v941 = vmax.f32 %v882, %v883
  %v942 = vmax.f32 %v886, %v887
  %v943 = vmax.f32 %v890, %v891
  %v944 = vmax.f32 %v894, %v895
  %v945 = vmax.f32 %v898, %v899
  %v946 = vmax.f32 %v902, %v903
  %v947 = vmax.f32 %v906, %v907
  %v948 = vmax.f32 %v910, %v911
  %v949 = vmax.f32 %v914, %v915
  %v950 = vmax.f32 %v918, %v919
  %v951 = vmax.f32 %v922, %v923
  %v952 = vmax.f32 %v924, %v938
  %v953 = vmax.f32 %v925, %v939
  %v954 = vmax.f32 %v926, %v940
  %v955 = vmax.f32 %v927, %v941
  %v956 = vmax.f32 %v928, %v942
  %v957 = vmax.f32 %v929, %v943
  %v958 = vmax.f32 %v930, %v944
  %v959 = vmax.f32 %v931, %v945
  %v960 = vmax.f32 %v932, %v946
  %v961 = vmax.f32 %v933, %v947
  %v962 = vmax.f32 %v934, %v948
  %v963 = vmax.f32 %v935, %v949
  %v964 = vmax.f32 %v936, %v950
  %v965 = vmax.f32 %v937, %v951
  %v966 = vpack.c.bf16 %v952, %v952
  %v967 = vpack.c.bf16 %v953, %v953
  %v968 = vpack.c.bf16 %v954, %v954
  %v969 = vpack.c.bf16 %v955, %v955
  %v970 = vpack.c.bf16 %v956, %v956
  %v971 = vpack.c.bf16 %v957, %v957
  %v972 = vpack.c.bf16 %v958, %v958
  %v973 = vpack.c.bf16 %v959, %v959
  %v974 = vpack.c.bf16 %v960, %v960
  %v975 = vpack.c.bf16 %v961, %v961
  %v976 = vpack.c.bf16 %v962, %v962
  %v977 = vpack.c.bf16 %v963, %v963
  %v978 = vpack.c.bf16 %v964, %v964
  %v979 = vpack.c.bf16 %v965, %v965
  %980 = vst [vmem:[#allocation2] sm:$0xf] %v966
  %981 = vst [vmem:[#allocation2 + $0x4] sm:$0xf] %v967
  %982 = vst [vmem:[#allocation2 + $0x8] sm:$0xf] %v968
  %983 = vst [vmem:[#allocation2 + $0xc] sm:$0xf] %v969
  %984 = vst [vmem:[#allocation2 + $0x10] sm:$0xf] %v970
  %985 = vst [vmem:[#allocation2 + $0x14] sm:$0xf] %v971
  %986 = vst [vmem:[#allocation2 + $0x18] sm:$0xf] %v972
  %987 = vst [vmem:[#allocation2 + $0x1c] sm:$0xf] %v973
  %988 = vst [vmem:[#allocation2 + $0x20] sm:$0xf] %v974
  %989 = vst [vmem:[#allocation2 + $0x24] sm:$0xf] %v975
  %990 = vst [vmem:[#allocation2 + $0x28] sm:$0xf] %v976
  %991 = vst [vmem:[#allocation2 + $0x2c] sm:$0xf] %v977
  %992 = vst [vmem:[#allocation2 + $0x30] sm:$0xf] %v978
  %993 = vst [vmem:[#allocation2 + $0x34] sm:$0x7] %v979
  %v994 = vld [vmem:[#allocation2] sm:$0xf]
  %v995 = vld [vmem:[#allocation2 + $0x4] sm:$0xf]
  %v996 = vld [vmem:[#allocation2 + $0x8] sm:$0xf]
  %v997 = vld [vmem:[#allocation2 + $0xc] sm:$0xf]
  %v998 = vld [vmem:[#allocation2 + $0x10] sm:$0xf]
  %v999 = vld [vmem:[#allocation2 + $0x14] sm:$0xf]
  %v1000 = vld [vmem:[#allocation2 + $0x18] sm:$0xf]
  %v1001 = vld [vmem:[#allocation2 + $0x1c] sm:$0xf]
  %v1002 = vld [vmem:[#allocation2 + $0x20] sm:$0xf]
  %v1003 = vld [vmem:[#allocation2 + $0x24] sm:$0xf]
  %v1004 = vld [vmem:[#allocation2 + $0x28] sm:$0xf]
  %v1005 = vld [vmem:[#allocation2 + $0x2c] sm:$0xf]
  %v1006 = vld [vmem:[#allocation2 + $0x30] sm:$0xf]
  %v1007 = vld [vmem:[#allocation2 + $0x34] sm:$0x1]
  %v1008 = vld [vmem:[#allocation2 + $0x34] sm:$0x3]
  %v1009 = vld [vmem:[#allocation2] sm:$0xe]
  %v1010 = vld [vmem:[#allocation2 + $0x34] sm:$0x7]
  %v1011 = vld [vmem:[#allocation2] sm:$0xc]
  %v1026 = vunpack.c.l.b16 %v994
  %v1027 = vunpack.c.l.b16 %v995
  %v1028 = vunpack.c.l.b16 %v996
  %v1029 = vunpack.c.l.b16 %v997
  %v1030 = vunpack.c.l.b16 %v998
  %v1031 = vunpack.c.l.b16 %v999
  %v1032 = vunpack.c.l.b16 %v1000
  %v1033 = vunpack.c.l.b16 %v1001
  %v1034 = vunpack.c.l.b16 %v1002
  %v1035 = vunpack.c.l.b16 %v1003
  %v1036 = vunpack.c.l.b16 %v1004
  %v1037 = vunpack.c.l.b16 %v1005
  %v1038 = vunpack.c.l.b16 %v1006
  %v1039 = vunpack.c.l.b16 %v1007
  %v1040 = vpack.c.b16 %v1027, %v1026
  %v1041 = vpack.c.b16 %v1029, %v1028
  %v1042 = vpack.c.b16 %v1031, %v1030
  %v1043 = vpack.c.b16 %v1033, %v1032
  %v1044 = vpack.c.b16 %v1035, %v1034
  %v1045 = vpack.c.b16 %v1037, %v1036
  %v1046 = vpack.c.b16 %v1039, %v1038
  %v1055 = vunpack.c.l.b16 %v1008
  %v1056 = vpack.c.b16 %v1055, %v1038
  %v1058 = vshrl.u32 %v1040, 16
  %v1060 = vshll.u32 %v1040, 16
  %v1062 = vrot.slane %v1060, 1
  %v1063 = vor.u32 %v1058, %v1062
  %v1065 = vshll.u32 %v1041, 16
  %v1067 = vrot.slane %v1065, 1
  %v1068 = vsel %vm87, %v1063, %v1067
  %v1069 = vshrl.u32 %v1041, 16
  %v1071 = vor.u32 %v1069, %v1067
  %v1073 = vshll.u32 %v1042, 16
  %v1075 = vrot.slane %v1073, 1
  %v1076 = vsel %vm87, %v1071, %v1075
  %v1077 = vshrl.u32 %v1042, 16
  %v1079 = vor.u32 %v1077, %v1075
  %v1081 = vshll.u32 %v1043, 16
  %v1083 = vrot.slane %v1081, 1
  %v1084 = vsel %vm87, %v1079, %v1083
  %v1085 = vshrl.u32 %v1043, 16
  %v1087 = vor.u32 %v1085, %v1083
  %v1089 = vshll.u32 %v1044, 16
  %v1091 = vrot.slane %v1089, 1
  %v1092 = vsel %vm87, %v1087, %v1091
  %v1093 = vshrl.u32 %v1044, 16
  %v1095 = vor.u32 %v1093, %v1091
  %v1097 = vshll.u32 %v1045, 16
  %v1099 = vrot.slane %v1097, 1
  %v1100 = vsel %vm87, %v1095, %v1099
  %v1101 = vshrl.u32 %v1045, 16
  %v1103 = vor.u32 %v1101, %v1099
  %v1105 = vshll.u32 %v1056, 16
  %v1107 = vrot.slane %v1105, 1
  %v1108 = vsel %vm87, %v1103, %v1107
  %v1109 = vshrl.u32 %v1056, 16
  %v1111 = vor.u32 %v1109, %v1107
  %v1120 = vunpack.c.l.b16 %v1009
  %v1121 = vpack.c.b16 %v1027, %v1120
  %v1122 = vrot.slane %v1121, 1
  %v1123 = vrot.slane %v1041, 1
  %v1124 = vsel %vm160, %v1122, %v1123
  %v1125 = vrot.slane %v1042, 1
  %v1126 = vsel %vm160, %v1123, %v1125
  %v1127 = vrot.slane %v1043, 1
  %v1128 = vsel %vm160, %v1125, %v1127
  %v1129 = vrot.slane %v1044, 1
  %v1130 = vsel %vm160, %v1127, %v1129
  %v1131 = vrot.slane %v1045, 1
  %v1132 = vsel %vm160, %v1129, %v1131
  %v1133 = vrot.slane %v1056, 1
  %v1134 = vsel %vm160, %v1131, %v1133
  %v1143 = vunpack.c.l.b16 %v1010
  %v1144 = vpack.c.b16 %v1143, %v1038
  %vm1145 = vsmask.f32 6400
  %v1147 = vshrl.u32 %v1121, 16
  %v1149 = vrot.slane %v1147, 1
  %v1150 = vshll.u32 %v1121, 16
  %v1152 = vrot.slane %v1150, 2
  %v1153 = vor.u32 %v1149, %v1152
  %v1154 = vrot.slane %v1069, 1
  %v1155 = vrot.slane %v1065, 2
  %v1156 = vor.u32 %v1154, %v1155
  %v1157 = vsel %vm1145, %v1153, %v1156
  %v1158 = vrot.slane %v1077, 1
  %v1159 = vrot.slane %v1073, 2
  %v1160 = vor.u32 %v1158, %v1159
  %v1161 = vsel %vm1145, %v1156, %v1160
  %v1162 = vrot.slane %v1085, 1
  %v1163 = vrot.slane %v1081, 2
  %v1164 = vor.u32 %v1162, %v1163
  %v1165 = vsel %vm1145, %v1160, %v1164
  %v1166 = vrot.slane %v1093, 1
  %v1167 = vrot.slane %v1089, 2
  %v1168 = vor.u32 %v1166, %v1167
  %v1169 = vsel %vm1145, %v1164, %v1168
  %v1170 = vrot.slane %v1101, 1
  %v1171 = vrot.slane %v1097, 2
  %v1172 = vor.u32 %v1170, %v1171
  %v1173 = vsel %vm1145, %v1168, %v1172
  %v1175 = vshrl.u32 %v1144, 16
  %v1177 = vrot.slane %v1175, 1
  %v1178 = vshll.u32 %v1144, 16
  %v1180 = vrot.slane %v1178, 2
  %v1181 = vor.u32 %v1177, %v1180
  %v1182 = vsel %vm1145, %v1172, %v1181
  %v1191 = vunpack.c.l.b16 %v1011
  %v1192 = vpack.c.b16 %v1027, %v1191
  %vm1193 = vcmask 1045504
  %v1194 = vrot.slane %v1192, 2
  %v1195 = vrot.slane %v1041, 2
  %v1196 = vsel %vm1193, %v1194, %v1195
  %v1197 = vrot.slane %v1042, 2
  %v1198 = vsel %vm1193, %v1195, %v1197
  %v1199 = vrot.slane %v1043, 2
  %v1200 = vsel %vm1193, %v1197, %v1199
  %v1201 = vrot.slane %v1044, 2
  %v1202 = vsel %vm1193, %v1199, %v1201
  %v1203 = vrot.slane %v1045, 2
  %v1204 = vsel %vm1193, %v1201, %v1203
  %v1205 = vrot.slane %v1144, 2
  %v1206 = vsel %vm1193, %v1203, %v1205
  %v1214 = vld [vmem:[%s3] sm:$0xff]
  %v1215 = vld [vmem:[%s3 + $0x8] sm:$0xff]
  %v1216 = vld [vmem:[%s3 + $0x10] sm:$0xff]
  %v1217 = vld [vmem:[%s3 + $0x18] sm:$0xff]
  %v1218 = vld [vmem:[%s3 + $0x20] sm:$0xff]
  %v1219 = vld [vmem:[%s3 + $0x28] sm:$0xff]
  %v1220 = vld [vmem:[%s3 + $0x30] sm:$0xff]
  %v1221 = vld [vmem:[%s3 + $0x38] sm:$0xff]
  %v1222 = vld [vmem:[%s3 + $0x40] sm:$0xff]
  %v1223 = vld [vmem:[%s3 + $0x48] sm:$0xff]
  %v1224 = vld [vmem:[%s3 + $0x50] sm:$0xff]
  %v1225 = vld [vmem:[%s3 + $0x58] sm:$0xff]
  %v1226 = vld [vmem:[%s3 + $0x60] sm:$0xff]
  %v1227 = vld [vmem:[%s3 + $0x68] sm:$0xff]
  %v1228 = vld [vmem:[%s3 + $0x70] sm:$0xff]
  %v1229 = vld [vmem:[%s3 + $0x78] sm:$0xff]
  %v1230 = vld [vmem:[%s3 + $0x80] sm:$0xff]
  %v1231 = vld [vmem:[%s3 + $0x88] sm:$0xff]
  %v1232 = vld [vmem:[%s3 + $0x90] sm:$0xff]
  %v1233 = vld [vmem:[%s3 + $0x98] sm:$0xff]
  %v1234 = vld [vmem:[%s3 + $0xa0] sm:$0xff]
  %v1235 = vld [vmem:[%s3 + $0xa8] sm:$0xff]
  %v1236 = vld [vmem:[%s3 + $0xb0] sm:$0xff]
  %v1237 = vld [vmem:[%s3 + $0xb8] sm:$0xff]
  %v1238 = vld [vmem:[%s3 + $0xc0] sm:$0xff]
  %v1239 = vld [vmem:[%s3 + $0xc8] sm:$0xff]
  %v1240 = vld [vmem:[%s3 + $0xd0] sm:$0xff]
  %v1241 = vld [vmem:[%s3 + $0xd8] sm:$0xff]
  %v1242 = vld [vmem:[%s3 + $0xe0] sm:$0xff]
  %v1243 = vld [vmem:[%s3 + $0xe8] sm:$0xff]
  %v1244 = vld [vmem:[%s3 + $0xf0] sm:$0xff]
  %v1245 = vld [vmem:[%s3 + $0xf8] sm:$0xff]
  %v1246 = vld [vmem:[%s3 + $0x100] sm:$0xff]
  %v1247 = vld [vmem:[%s3 + $0x108] sm:$0xff]
  %v1248 = vld [vmem:[%s3 + $0x110] sm:$0xff]
  %v1249 = vld [vmem:[%s3 + $0x118] sm:$0xff]
  %v1250 = vld [vmem:[%s3 + $0x120] sm:$0xff]
  %v1251 = vld [vmem:[%s3 + $0x128] sm:$0xff]
  %v1252 = vld [vmem:[%s3 + $0x130] sm:$0xff]
  %v1253 = vld [vmem:[%s3 + $0x138] sm:$0xff]
  %v1254 = vld [vmem:[%s3 + $0x140] sm:$0xff]
  %v1255 = vld [vmem:[%s3 + $0x148] sm:$0xff]
  %v1256 = vld [vmem:[%s3 + $0x150] sm:$0xff]
  %v1257 = vld [vmem:[%s3 + $0x158] sm:$0xff]
  %v1258 = vld [vmem:[%s3 + $0x160] sm:$0xff]
  %v1259 = vld [vmem:[%s3 + $0x168] sm:$0xff]
  %v1260 = vld [vmem:[%s3 + $0x170] sm:$0xff]
  %v1261 = vld [vmem:[%s3 + $0x178] sm:$0xff]
  %v1262 = vld [vmem:[%s3 + $0x180] sm:$0xff]
  %v1263 = vld [vmem:[%s3 + $0x188] sm:$0xff]
  %v1264 = vld [vmem:[%s3 + $0x190] sm:$0xff]
  %v1265 = vld [vmem:[%s3 + $0x198] sm:$0xff]
  %v1266 = vld [vmem:[%s3 + $0x1a0] sm:$0xff]
  %v1267 = vld [vmem:[%s3 + $0x1a8] sm:$0xff]
  %v1268 = vld [vmem:[%s3 + $0x1b0] sm:$0xff]
  %v1269 = vld [vmem:[%s3 + $0x1b8] sm:$0xff]
  %v1270 = vld [vmem:[%s3 + $0x1c0] sm:$0xff]
  %v1271 = vld [vmem:[%s3 + $0x1c8] sm:$0xff]
  %v1272 = vld [vmem:[%s3 + $0x1d0] sm:$0xff]
  %v1273 = vld [vmem:[%s3 + $0x1d8] sm:$0xff]
  %v1274 = vld [vmem:[%s3 + $0x1e0] sm:$0xff]
  %v1275 = vld [vmem:[%s3 + $0x1e8] sm:$0xff]
  %v1276 = vld [vmem:[%s3 + $0x1f0] sm:$0xff]
  %v1277 = vld [vmem:[%s3 + $0x1f8] sm:$0xff]
  %v1278 = vld [vmem:[%s3 + $0x200] sm:$0xff]
  %v1279 = vld [vmem:[%s3 + $0x208] sm:$0xff]
  %v1280 = vld [vmem:[%s3 + $0x210] sm:$0xff]
  %v1281 = vld [vmem:[%s3 + $0x218] sm:$0xff]
  %v1282 = vld [vmem:[%s3 + $0x220] sm:$0xff]
  %v1283 = vld [vmem:[%s3 + $0x228] sm:$0xff]
  %v1284 = vld [vmem:[%s3 + $0x230] sm:$0xff]
  %v1285 = vld [vmem:[%s3 + $0x238] sm:$0xff]
  %v1286 = vld [vmem:[%s3 + $0x240] sm:$0xff]
  %v1287 = vld [vmem:[%s3 + $0x248] sm:$0xff]
  %v1288 = vld [vmem:[%s3 + $0x250] sm:$0xff]
  %v1289 = vld [vmem:[%s3 + $0x258] sm:$0xff]
  %v1290 = vld [vmem:[%s3 + $0x260] sm:$0xff]
  %v1291 = vld [vmem:[%s3 + $0x268] sm:$0xff]
  %v1292 = vld [vmem:[%s3 + $0x270] sm:$0xff]
  %v1293 = vld [vmem:[%s3 + $0x278] sm:$0xff]
  %v1294 = vld [vmem:[%s4] sm:$0x3]
  %v1296 = vperm.slane %v1294, 0
  %v1297 = vperm.slane %v1294, 1
  %v1380 = vunpack.c.l.b16 %v1214
  %v1381 = vunpack.c.h.b16 %v1214
  %v1382 = vunpack.c.l.b16 %v1215
  %v1383 = vunpack.c.h.b16 %v1215
  %v1384 = vunpack.c.l.b16 %v1216
  %v1385 = vunpack.c.h.b16 %v1216
  %v1386 = vunpack.c.l.b16 %v1217
  %v1387 = vunpack.c.h.b16 %v1217
  %v1388 = vunpack.c.l.b16 %v1218
  %v1389 = vunpack.c.h.b16 %v1218
  %v1390 = vunpack.c.l.b16 %v1219
  %v1391 = vunpack.c.h.b16 %v1219
  %v1392 = vunpack.c.l.b16 %v1220
  %v1393 = vunpack.c.h.b16 %v1220
  %v1394 = vunpack.c.l.b16 %v1221
  %v1395 = vunpack.c.h.b16 %v1221
  %v1396 = vunpack.c.l.b16 %v1222
  %v1397 = vunpack.c.h.b16 %v1222
  %v1398 = vunpack.c.l.b16 %v1223
  %v1399 = vunpack.c.h.b16 %v1223
  %v1400 = vunpack.c.l.b16 %v1224
  %v1401 = vunpack.c.h.b16 %v1224
  %v1402 = vunpack.c.l.b16 %v1225
  %v1403 = vunpack.c.h.b16 %v1225
  %v1404 = vunpack.c.l.b16 %v1226
  %v1405 = vunpack.c.h.b16 %v1226
  %v1406 = vunpack.c.l.b16 %v1227
  %v1407 = vunpack.c.h.b16 %v1227
  %v1408 = vunpack.c.l.b16 %v1228
  %v1409 = vunpack.c.h.b16 %v1228
  %v1410 = vunpack.c.l.b16 %v1229
  %v1411 = vunpack.c.h.b16 %v1229
  %v1412 = vunpack.c.l.b16 %v1230
  %v1413 = vunpack.c.h.b16 %v1230
  %v1414 = vunpack.c.l.b16 %v1231
  %v1415 = vunpack.c.h.b16 %v1231
  %v1416 = vunpack.c.l.b16 %v1232
  %v1417 = vunpack.c.h.b16 %v1232
  %v1418 = vunpack.c.l.b16 %v1233
  %v1419 = vunpack.c.h.b16 %v1233
  %v1420 = vunpack.c.l.b16 %v1234
  %v1421 = vunpack.c.h.b16 %v1234
  %v1422 = vunpack.c.l.b16 %v1235
  %v1423 = vunpack.c.h.b16 %v1235
  %v1424 = vunpack.c.l.b16 %v1236
  %v1425 = vunpack.c.h.b16 %v1236
  %v1426 = vunpack.c.l.b16 %v1237
  %v1427 = vunpack.c.h.b16 %v1237
  %v1428 = vunpack.c.l.b16 %v1238
  %v1429 = vunpack.c.h.b16 %v1238
  %v1430 = vunpack.c.l.b16 %v1239
  %v1431 = vunpack.c.h.b16 %v1239
  %v1432 = vunpack.c.l.b16 %v1240
  %v1433 = vunpack.c.h.b16 %v1240
  %v1434 = vunpack.c.l.b16 %v1241
  %v1435 = vunpack.c.h.b16 %v1241
  %v1436 = vunpack.c.l.b16 %v1242
  %v1437 = vunpack.c.h.b16 %v1242
  %v1438 = vunpack.c.l.b16 %v1243
  %v1439 = vunpack.c.h.b16 %v1243
  %v1440 = vunpack.c.l.b16 %v1244
  %v1441 = vunpack.c.h.b16 %v1244
  %v1442 = vunpack.c.l.b16 %v1245
  %v1443 = vunpack.c.h.b16 %v1245
  %v1444 = vunpack.c.l.b16 %v1246
  %v1445 = vunpack.c.h.b16 %v1246
  %v1446 = vunpack.c.l.b16 %v1247
  %v1447 = vunpack.c.h.b16 %v1247
  %v1448 = vunpack.c.l.b16 %v1248
  %v1449 = vunpack.c.h.b16 %v1248
  %v1450 = vunpack.c.l.b16 %v1249
  %v1451 = vunpack.c.h.b16 %v1249
  %v1452 = vunpack.c.l.b16 %v1250
  %v1453 = vunpack.c.h.b16 %v1250
  %v1454 = vunpack.c.l.b16 %v1251
  %v1455 = vunpack.c.h.b16 %v1251
  %v1456 = vunpack.c.l.b16 %v1252
  %v1457 = vunpack.c.h.b16 %v1252
  %v1458 = vunpack.c.l.b16 %v1253
  %v1459 = vunpack.c.h.b16 %v1253
  %v1460 = vunpack.c.l.b16 %v1254
  %v1461 = vunpack.c.h.b16 %v1254
  %v1462 = vunpack.c.l.b16 %v1255
  %v1463 = vunpack.c.h.b16 %v1255
  %v1464 = vunpack.c.l.b16 %v1256
  %v1465 = vunpack.c.h.b16 %v1256
  %v1466 = vunpack.c.l.b16 %v1257
  %v1467 = vunpack.c.h.b16 %v1257
  %v1468 = vunpack.c.l.b16 %v1258
  %v1469 = vunpack.c.h.b16 %v1258
  %v1470 = vunpack.c.l.b16 %v1259
  %v1471 = vunpack.c.h.b16 %v1259
  %v1472 = vunpack.c.l.b16 %v1260
  %v1473 = vunpack.c.h.b16 %v1260
  %v1474 = vunpack.c.l.b16 %v1261
  %v1475 = vunpack.c.h.b16 %v1261
  %v1476 = vunpack.c.l.b16 %v1262
  %v1477 = vunpack.c.h.b16 %v1262
  %v1478 = vunpack.c.l.b16 %v1263
  %v1479 = vunpack.c.h.b16 %v1263
  %v1480 = vunpack.c.l.b16 %v1264
  %v1481 = vunpack.c.h.b16 %v1264
  %v1482 = vunpack.c.l.b16 %v1265
  %v1483 = vunpack.c.h.b16 %v1265
  %v1484 = vunpack.c.l.b16 %v1266
  %v1485 = vunpack.c.h.b16 %v1266
  %v1486 = vunpack.c.l.b16 %v1267
  %v1487 = vunpack.c.h.b16 %v1267
  %v1488 = vunpack.c.l.b16 %v1268
  %v1489 = vunpack.c.h.b16 %v1268
  %v1490 = vunpack.c.l.b16 %v1269
  %v1491 = vunpack.c.h.b16 %v1269
  %v1492 = vunpack.c.l.b16 %v1270
  %v1493 = vunpack.c.h.b16 %v1270
  %v1494 = vunpack.c.l.b16 %v1271
  %v1495 = vunpack.c.h.b16 %v1271
  %v1496 = vunpack.c.l.b16 %v1272
  %v1497 = vunpack.c.h.b16 %v1272
  %v1498 = vunpack.c.l.b16 %v1273
  %v1499 = vunpack.c.h.b16 %v1273
  %v1500 = vunpack.c.l.b16 %v1274
  %v1501 = vunpack.c.h.b16 %v1274
  %v1502 = vunpack.c.l.b16 %v1275
  %v1503 = vunpack.c.h.b16 %v1275
  %v1504 = vunpack.c.l.b16 %v1276
  %v1505 = vunpack.c.h.b16 %v1276
  %v1506 = vunpack.c.l.b16 %v1277
  %v1507 = vunpack.c.h.b16 %v1277
  %v1508 = vunpack.c.l.b16 %v1278
  %v1509 = vunpack.c.h.b16 %v1278
  %v1510 = vunpack.c.l.b16 %v1279
  %v1511 = vunpack.c.h.b16 %v1279
  %v1512 = vunpack.c.l.b16 %v1280
  %v1513 = vunpack.c.h.b16 %v1280
  %v1514 = vunpack.c.l.b16 %v1281
  %v1515 = vunpack.c.h.b16 %v1281
  %v1516 = vunpack.c.l.b16 %v1282
  %v1517 = vunpack.c.h.b16 %v1282
  %v1518 = vunpack.c.l.b16 %v1283
  %v1519 = vunpack.c.h.b16 %v1283
  %v1520 = vunpack.c.l.b16 %v1284
  %v1521 = vunpack.c.h.b16 %v1284
  %v1522 = vunpack.c.l.b16 %v1285
  %v1523 = vunpack.c.h.b16 %v1285
  %v1524 = vunpack.c.l.b16 %v1286
  %v1525 = vunpack.c.h.b16 %v1286
  %v1526 = vunpack.c.l.b16 %v1287
  %v1527 = vunpack.c.h.b16 %v1287
  %v1528 = vunpack.c.l.b16 %v1288
  %v1529 = vunpack.c.h.b16 %v1288
  %v1530 = vunpack.c.l.b16 %v1289
  %v1531 = vunpack.c.h.b16 %v1289
  %v1532 = vunpack.c.l.b16 %v1290
  %v1533 = vunpack.c.h.b16 %v1290
  %v1534 = vunpack.c.l.b16 %v1291
  %v1535 = vunpack.c.h.b16 %v1291
  %v1536 = vunpack.c.l.b16 %v1292
  %v1537 = vunpack.c.h.b16 %v1292
  %v1538 = vunpack.c.l.b16 %v1293
  %v1539 = vunpack.c.h.b16 %v1293
  %v1540 = vpack.c.b16 %v1382, %v1380
  %v1541 = vpack.c.b16 %v1383, %v1381
  %v1542 = vpack.c.b16 %v1386, %v1384
  %v1543 = vpack.c.b16 %v1387, %v1385
  %v1544 = vpack.c.b16 %v1390, %v1388
  %v1545 = vpack.c.b16 %v1391, %v1389
  %v1546 = vpack.c.b16 %v1394, %v1392
  %v1547 = vpack.c.b16 %v1395, %v1393
  %v1548 = vpack.c.b16 %v1398, %v1396
  %v1549 = vpack.c.b16 %v1399, %v1397
  %v1550 = vpack.c.b16 %v1402, %v1400
  %v1551 = vpack.c.b16 %v1403, %v1401
  %v1552 = vpack.c.b16 %v1406, %v1404
  %v1553 = vpack.c.b16 %v1407, %v1405
  %v1554 = vpack.c.b16 %v1410, %v1408
  %v1555 = vpack.c.b16 %v1411, %v1409
  %v1556 = vpack.c.b16 %v1414, %v1412
  %v1557 = vpack.c.b16 %v1415, %v1413
  %v1558 = vpack.c.b16 %v1418, %v1416
  %v1559 = vpack.c.b16 %v1419, %v1417
  %v1560 = vpack.c.b16 %v1422, %v1420
  %v1561 = vpack.c.b16 %v1423, %v1421
  %v1562 = vpack.c.b16 %v1426, %v1424
  %v1563 = vpack.c.b16 %v1427, %v1425
  %v1564 = vpack.c.b16 %v1430, %v1428
  %v1565 = vpack.c.b16 %v1431, %v1429
  %v1566 = vpack.c.b16 %v1434, %v1432
  %v1567 = vpack.c.b16 %v1435, %v1433
  %v1568 = vpack.c.b16 %v1438, %v1436
  %v1569 = vpack.c.b16 %v1439, %v1437
  %v1570 = vpack.c.b16 %v1442, %v1440
  %v1571 = vpack.c.b16 %v1443, %v1441
  %v1572 = vpack.c.b16 %v1446, %v1444
  %v1573 = vpack.c.b16 %v1447, %v1445
  %v1574 = vpack.c.b16 %v1450, %v1448
  %v1575 = vpack.c.b16 %v1451, %v1449
  %v1576 = vpack.c.b16 %v1454, %v1452
  %v1577 = vpack.c.b16 %v1455, %v1453
  %v1578 = vpack.c.b16 %v1458, %v1456
  %v1579 = vpack.c.b16 %v1459, %v1457
  %v1580 = vpack.c.b16 %v1462, %v1460
  %v1581 = vpack.c.b16 %v1463, %v1461
  %v1582 = vpack.c.b16 %v1466, %v1464
  %v1583 = vpack.c.b16 %v1467, %v1465
  %v1584 = vpack.c.b16 %v1470, %v1468
  %v1585 = vpack.c.b16 %v1471, %v1469
  %v1586 = vpack.c.b16 %v1474, %v1472
  %v1587 = vpack.c.b16 %v1475, %v1473
  %v1588 = vpack.c.b16 %v1478, %v1476
  %v1589 = vpack.c.b16 %v1479, %v1477
  %v1590 = vpack.c.b16 %v1482, %v1480
  %v1591 = vpack.c.b16 %v1483, %v1481
  %v1592 = vpack.c.b16 %v1486, %v1484
  %v1593 = vpack.c.b16 %v1487, %v1485
  %v1594 = vpack.c.b16 %v1490, %v1488
  %v1595 = vpack.c.b16 %v1491, %v1489
  %v1596 = vpack.c.b16 %v1494, %v1492
  %v1597 = vpack.c.b16 %v1495, %v1493
  %v1598 = vpack.c.b16 %v1498, %v1496
  %v1599 = vpack.c.b16 %v1499, %v1497
  %v1600 = vpack.c.b16 %v1502, %v1500
  %v1601 = vpack.c.b16 %v1503, %v1501
  %v1602 = vpack.c.b16 %v1506, %v1504
  %v1603 = vpack.c.b16 %v1507, %v1505
  %v1604 = vpack.c.b16 %v1510, %v1508
  %v1605 = vpack.c.b16 %v1511, %v1509
  %v1606 = vpack.c.b16 %v1514, %v1512
  %v1607 = vpack.c.b16 %v1515, %v1513
  %v1608 = vpack.c.b16 %v1518, %v1516
  %v1609 = vpack.c.b16 %v1519, %v1517
  %v1610 = vpack.c.b16 %v1522, %v1520
  %v1611 = vpack.c.b16 %v1523, %v1521
  %v1612 = vpack.c.b16 %v1526, %v1524
  %v1613 = vpack.c.b16 %v1527, %v1525
  %v1614 = vpack.c.b16 %v1530, %v1528
  %v1615 = vpack.c.b16 %v1531, %v1529
  %v1616 = vpack.c.b16 %v1534, %v1532
  %v1617 = vpack.c.b16 %v1535, %v1533
  %v1618 = vpack.c.b16 %v1538, %v1536
  %v1619 = vpack.c.b16 %v1539, %v1537
  %1700 = vmatpush.bf16.msra.mxu0 %v1554
  %1701 = vmatpush.bf16.msra.mxu0 %v1552
  %1702 = vmatpush.bf16.msra.mxu0 %v1550
  %1703 = vmatpush.bf16.msra.mxu0 %v1548
  %1704 = vmatpush.bf16.msra.mxu0 %v1546
  %1705 = vmatpush.bf16.msra.mxu0 %v1544
  %1706 = vmatpush.bf16.msra.mxu0 %v1542
  %1707 = vmatpush.bf16.msra.mxu0 %v1540
  %1708 = vmatmul.bf16.gmra.mxu0 %v1040
  %v1709 = vpop.f32.mrf.mxu0
  %v1710 = vadd.f32 %v1296, %v1709
  %v1711 = vpop.f32.mrf.mxu0
  %v1712 = vadd.f32 %v1296, %v1711
  %1713 = vmatmul.bf16.gmra.mxu0 %v1041
  %v1714 = vpop.f32.mrf.mxu0
  %v1715 = vadd.f32 %v1296, %v1714
  %v1716 = vpop.f32.mrf.mxu0
  %v1717 = vadd.f32 %v1296, %v1716
  %1718 = vmatmul.bf16.gmra.mxu0 %v1042
  %v1719 = vpop.f32.mrf.mxu0
  %v1720 = vadd.f32 %v1296, %v1719
  %v1721 = vpop.f32.mrf.mxu0
  %v1722 = vadd.f32 %v1296, %v1721
  %1723 = vmatmul.bf16.gmra.mxu0 %v1043
  %v1724 = vpop.f32.mrf.mxu0
  %v1725 = vadd.f32 %v1296, %v1724
  %v1726 = vpop.f32.mrf.mxu0
  %v1727 = vadd.f32 %v1296, %v1726
  %1728 = vmatmul.bf16.gmra.mxu0 %v1044
  %v1729 = vpop.f32.mrf.mxu0
  %v1730 = vadd.f32 %v1296, %v1729
  %v1731 = vpop.f32.mrf.mxu0
  %v1732 = vadd.f32 %v1296, %v1731
  %1733 = vmatmul.bf16.gmra.mxu0 %v1045
  %v1734 = vpop.f32.mrf.mxu0
  %v1735 = vadd.f32 %v1296, %v1734
  %v1736 = vpop.f32.mrf.mxu0
  %v1737 = vadd.f32 %v1296, %v1736
  %1738 = vmatmul.bf16.gmra.mxu0 %v1046
  %v1739 = vpop.f32.mrf.mxu0
  %v1740 = vadd.f32 %v1296, %v1739
  %v1741 = vpop.f32.mrf.mxu0
  %v1742 = vadd.f32 %v1296, %v1741
  %1743 = vdwg.mxu0
  %1744 = vmatpush.bf16.msra.mxu0 %v1570
  %1745 = vmatpush.bf16.msra.mxu0 %v1568
  %1746 = vmatpush.bf16.msra.mxu0 %v1566
  %1747 = vmatpush.bf16.msra.mxu0 %v1564
  %1748 = vmatpush.bf16.msra.mxu0 %v1562
  %1749 = vmatpush.bf16.msra.mxu0 %v1560
  %1750 = vmatpush.bf16.msra.mxu0 %v1558
  %1751 = vmatpush.bf16.msra.mxu0 %v1556
  %1752 = vmatmul.bf16.gmra.mxu0 %v1068
  %v1753 = vpop.f32.mrf.mxu0
  %v1754 = vadd.f32 %v1710, %v1753
  %v1755 = vpop.f32.mrf.mxu0
  %v1756 = vadd.f32 %v1712, %v1755
  %1757 = vmatmul.bf16.gmra.mxu0 %v1076
  %v1758 = vpop.f32.mrf.mxu0
  %v1759 = vadd.f32 %v1715, %v1758
  %v1760 = vpop.f32.mrf.mxu0
  %v1761 = vadd.f32 %v1717, %v1760
  %1762 = vmatmul.bf16.gmra.mxu0 %v1084
  %v1763 = vpop.f32.mrf.mxu0
  %v1764 = vadd.f32 %v1720, %v1763
  %v1765 = vpop.f32.mrf.mxu0
  %v1766 = vadd.f32 %v1722, %v1765
  %1767 = vmatmul.bf16.gmra.mxu0 %v1092
  %v1768 = vpop.f32.mrf.mxu0
  %v1769 = vadd.f32 %v1725, %v1768
  %v1770 = vpop.f32.mrf.mxu0
  %v1771 = vadd.f32 %v1727, %v1770
  %1772 = vmatmul.bf16.gmra.mxu0 %v1100
  %v1773 = vpop.f32.mrf.mxu0
  %v1774 = vadd.f32 %v1730, %v1773
  %v1775 = vpop.f32.mrf.mxu0
  %v1776 = vadd.f32 %v1732, %v1775
  %1777 = vmatmul.bf16.gmra.mxu0 %v1108
  %v1778 = vpop.f32.mrf.mxu0
  %v1779 = vadd.f32 %v1735, %v1778
  %v1780 = vpop.f32.mrf.mxu0
  %v1781 = vadd.f32 %v1737, %v1780
  %1782 = vmatmul.bf16.gmra.mxu0 %v1111
  %v1783 = vpop.f32.mrf.mxu0
  %v1784 = vadd.f32 %v1740, %v1783
  %v1785 = vpop.f32.mrf.mxu0
  %v1786 = vadd.f32 %v1742, %v1785
  %1787 = vdwg.mxu0
  %1788 = vmatpush.bf16.msra.mxu0 %v1586
  %1789 = vmatpush.bf16.msra.mxu0 %v1584
  %1790 = vmatpush.bf16.msra.mxu0 %v1582
  %1791 = vmatpush.bf16.msra.mxu0 %v1580
  %1792 = vmatpush.bf16.msra.mxu0 %v1578
  %1793 = vmatpush.bf16.msra.mxu0 %v1576
  %1794 = vmatpush.bf16.msra.mxu0 %v1574
  %1795 = vmatpush.bf16.msra.mxu0 %v1572
  %1796 = vmatmul.bf16.gmra.mxu0 %v1124
  %v1797 = vpop.f32.mrf.mxu0
  %v1798 = vadd.f32 %v1754, %v1797
  %v1799 = vpop.f32.mrf.mxu0
  %v1800 = vadd.f32 %v1756, %v1799
  %1801 = vmatmul.bf16.gmra.mxu0 %v1126
  %v1802 = vpop.f32.mrf.mxu0
  %v1803 = vadd.f32 %v1759, %v1802
  %v1804 = vpop.f32.mrf.mxu0
  %v1805 = vadd.f32 %v1761, %v1804
  %1806 = vmatmul.bf16.gmra.mxu0 %v1128
  %v1807 = vpop.f32.mrf.mxu0
  %v1808 = vadd.f32 %v1764, %v1807
  %v1809 = vpop.f32.mrf.mxu0
  %v1810 = vadd.f32 %v1766, %v1809
  %1811 = vmatmul.bf16.gmra.mxu0 %v1130
  %v1812 = vpop.f32.mrf.mxu0
  %v1813 = vadd.f32 %v1769, %v1812
  %v1814 = vpop.f32.mrf.mxu0
  %v1815 = vadd.f32 %v1771, %v1814
  %1816 = vmatmul.bf16.gmra.mxu0 %v1132
  %v1817 = vpop.f32.mrf.mxu0
  %v1818 = vadd.f32 %v1774, %v1817
  %v1819 = vpop.f32.mrf.mxu0
  %v1820 = vadd.f32 %v1776, %v1819
  %1821 = vmatmul.bf16.gmra.mxu0 %v1134
  %v1822 = vpop.f32.mrf.mxu0
  %v1823 = vadd.f32 %v1779, %v1822
  %v1824 = vpop.f32.mrf.mxu0
  %v1825 = vadd.f32 %v1781, %v1824
  %1826 = vmatmul.bf16.gmra.mxu0 %v1133
  %v1827 = vpop.f32.mrf.mxu0
  %v1828 = vadd.f32 %v1784, %v1827
  %v1829 = vpop.f32.mrf.mxu0
  %v1830 = vadd.f32 %v1786, %v1829
  %1831 = vdwg.mxu0
  %1832 = vmatpush.bf16.msra.mxu0 %v1602
  %1833 = vmatpush.bf16.msra.mxu0 %v1600
  %1834 = vmatpush.bf16.msra.mxu0 %v1598
  %1835 = vmatpush.bf16.msra.mxu0 %v1596
  %1836 = vmatpush.bf16.msra.mxu0 %v1594
  %1837 = vmatpush.bf16.msra.mxu0 %v1592
  %1838 = vmatpush.bf16.msra.mxu0 %v1590
  %1839 = vmatpush.bf16.msra.mxu0 %v1588
  %1840 = vmatmul.bf16.gmra.mxu0 %v1157
  %v1841 = vpop.f32.mrf.mxu0
  %v1842 = vadd.f32 %v1798, %v1841
  %v1843 = vpop.f32.mrf.mxu0
  %v1844 = vadd.f32 %v1800, %v1843
  %1845 = vmatmul.bf16.gmra.mxu0 %v1161
  %v1846 = vpop.f32.mrf.mxu0
  %v1847 = vadd.f32 %v1803, %v1846
  %v1848 = vpop.f32.mrf.mxu0
  %v1849 = vadd.f32 %v1805, %v1848
  %1850 = vmatmul.bf16.gmra.mxu0 %v1165
  %v1851 = vpop.f32.mrf.mxu0
  %v1852 = vadd.f32 %v1808, %v1851
  %v1853 = vpop.f32.mrf.mxu0
  %v1854 = vadd.f32 %v1810, %v1853
  %1855 = vmatmul.bf16.gmra.mxu0 %v1169
  %v1856 = vpop.f32.mrf.mxu0
  %v1857 = vadd.f32 %v1813, %v1856
  %v1858 = vpop.f32.mrf.mxu0
  %v1859 = vadd.f32 %v1815, %v1858
  %1860 = vmatmul.bf16.gmra.mxu0 %v1173
  %v1861 = vpop.f32.mrf.mxu0
  %v1862 = vadd.f32 %v1818, %v1861
  %v1863 = vpop.f32.mrf.mxu0
  %v1864 = vadd.f32 %v1820, %v1863
  %1865 = vmatmul.bf16.gmra.mxu0 %v1182
  %v1866 = vpop.f32.mrf.mxu0
  %v1867 = vadd.f32 %v1823, %v1866
  %v1868 = vpop.f32.mrf.mxu0
  %v1869 = vadd.f32 %v1825, %v1868
  %1870 = vmatmul.bf16.gmra.mxu0 %v1181
  %v1871 = vpop.f32.mrf.mxu0
  %v1872 = vadd.f32 %v1828, %v1871
  %v1873 = vpop.f32.mrf.mxu0
  %v1874 = vadd.f32 %v1830, %v1873
  %1875 = vdwg.mxu0
  %1876 = vmatpush.bf16.msra.mxu0 %v1618
  %1877 = vmatpush.bf16.msra.mxu0 %v1616
  %1878 = vmatpush.bf16.msra.mxu0 %v1614
  %1879 = vmatpush.bf16.msra.mxu0 %v1612
  %1880 = vmatpush.bf16.msra.mxu0 %v1610
  %1881 = vmatpush.bf16.msra.mxu0 %v1608
  %1882 = vmatpush.bf16.msra.mxu0 %v1606
  %1883 = vmatpush.bf16.msra.mxu0 %v1604
  %1884 = vmatmul.bf16.gmra.mxu0 %v1196
  %v1885 = vpop.f32.mrf.mxu0
  %v1886 = vadd.f32 %v1842, %v1885
  %v1887 = vpop.f32.mrf.mxu0
  %v1888 = vadd.f32 %v1844, %v1887
  %1889 = vmatmul.bf16.gmra.mxu0 %v1198
  %v1890 = vpop.f32.mrf.mxu0
  %v1891 = vadd.f32 %v1847, %v1890
  %v1892 = vpop.f32.mrf.mxu0
  %v1893 = vadd.f32 %v1849, %v1892
  %1894 = vmatmul.bf16.gmra.mxu0 %v1200
  %v1895 = vpop.f32.mrf.mxu0
  %v1896 = vadd.f32 %v1852, %v1895
  %v1897 = vpop.f32.mrf.mxu0
  %v1898 = vadd.f32 %v1854, %v1897
  %1899 = vmatmul.bf16.gmra.mxu0 %v1202
  %v1900 = vpop.f32.mrf.mxu0
  %v1901 = vadd.f32 %v1857, %v1900
  %v1902 = vpop.f32.mrf.mxu0
  %v1903 = vadd.f32 %v1859, %v1902
  %1904 = vmatmul.bf16.gmra.mxu0 %v1204
  %v1905 = vpop.f32.mrf.mxu0
  %v1906 = vadd.f32 %v1862, %v1905
  %v1907 = vpop.f32.mrf.mxu0
  %v1908 = vadd.f32 %v1864, %v1907
  %1909 = vmatmul.bf16.gmra.mxu0 %v1206
  %v1910 = vpop.f32.mrf.mxu0
  %v1911 = vadd.f32 %v1867, %v1910
  %v1912 = vpop.f32.mrf.mxu0
  %v1913 = vadd.f32 %v1869, %v1912
  %1914 = vmatmul.bf16.gmra.mxu0 %v1205
  %v1915 = vpop.f32.mrf.mxu0
  %v1916 = vadd.f32 %v1872, %v1915
  %v1917 = vpop.f32.mrf.mxu0
  %v1918 = vadd.f32 %v1874, %v1917
  %1919 = vdwg.mxu0
  %1920 = vmatpush.bf16.msra.mxu0 %v1555
  %1921 = vmatpush.bf16.msra.mxu0 %v1553
  %1922 = vmatpush.bf16.msra.mxu0 %v1551
  %1923 = vmatpush.bf16.msra.mxu0 %v1549
  %1924 = vmatpush.bf16.msra.mxu0 %v1547
  %1925 = vmatpush.bf16.msra.mxu0 %v1545
  %1926 = vmatpush.bf16.msra.mxu0 %v1543
  %1927 = vmatpush.bf16.msra.mxu0 %v1541
  %1928 = vmatmul.bf16.gmra.mxu0 %v1040
  %v1929 = vpop.f32.mrf.mxu0
  %v1930 = vadd.f32 %v1297, %v1929
  %v1931 = vpop.f32.mrf.mxu0
  %v1932 = vadd.f32 %v1297, %v1931
  %1933 = vmatmul.bf16.gmra.mxu0 %v1041
  %v1934 = vpop.f32.mrf.mxu0
  %v1935 = vadd.f32 %v1297, %v1934
  %v1936 = vpop.f32.mrf.mxu0
  %v1937 = vadd.f32 %v1297, %v1936
  %1938 = vmatmul.bf16.gmra.mxu0 %v1042
  %v1939 = vpop.f32.mrf.mxu0
  %v1940 = vadd.f32 %v1297, %v1939
  %v1941 = vpop.f32.mrf.mxu0
  %v1942 = vadd.f32 %v1297, %v1941
  %1943 = vmatmul.bf16.gmra.mxu0 %v1043
  %v1944 = vpop.f32.mrf.mxu0
  %v1945 = vadd.f32 %v1297, %v1944
  %v1946 = vpop.f32.mrf.mxu0
  %v1947 = vadd.f32 %v1297, %v1946
  %1948 = vmatmul.bf16.gmra.mxu0 %v1044
  %v1949 = vpop.f32.mrf.mxu0
  %v1950 = vadd.f32 %v1297, %v1949
  %v1951 = vpop.f32.mrf.mxu0
  %v1952 = vadd.f32 %v1297, %v1951
  %1953 = vmatmul.bf16.gmra.mxu0 %v1045
  %v1954 = vpop.f32.mrf.mxu0
  %v1955 = vadd.f32 %v1297, %v1954
  %v1956 = vpop.f32.mrf.mxu0
  %v1957 = vadd.f32 %v1297, %v1956
  %1958 = vmatmul.bf16.gmra.mxu0 %v1046
  %v1959 = vpop.f32.mrf.mxu0
  %v1960 = vadd.f32 %v1297, %v1959
  %v1961 = vpop.f32.mrf.mxu0
  %v1962 = vadd.f32 %v1297, %v1961
  %1963 = vdwg.mxu0
  %1964 = vmatpush.bf16.msra.mxu0 %v1571
  %1965 = vmatpush.bf16.msra.mxu0 %v1569
  %1966 = vmatpush.bf16.msra.mxu0 %v1567
  %1967 = vmatpush.bf16.msra.mxu0 %v1565
  %1968 = vmatpush.bf16.msra.mxu0 %v1563
  %1969 = vmatpush.bf16.msra.mxu0 %v1561
  %1970 = vmatpush.bf16.msra.mxu0 %v1559
  %1971 = vmatpush.bf16.msra.mxu0 %v1557
  %1972 = vmatmul.bf16.gmra.mxu0 %v1068
  %v1973 = vpop.f32.mrf.mxu0
  %v1974 = vadd.f32 %v1930, %v1973
  %v1975 = vpop.f32.mrf.mxu0
  %v1976 = vadd.f32 %v1932, %v1975
  %1977 = vmatmul.bf16.gmra.mxu0 %v1076
  %v1978 = vpop.f32.mrf.mxu0
  %v1979 = vadd.f32 %v1935, %v1978
  %v1980 = vpop.f32.mrf.mxu0
  %v1981 = vadd.f32 %v1937, %v1980
  %1982 = vmatmul.bf16.gmra.mxu0 %v1084
  %v1983 = vpop.f32.mrf.mxu0
  %v1984 = vadd.f32 %v1940, %v1983
  %v1985 = vpop.f32.mrf.mxu0
  %v1986 = vadd.f32 %v1942, %v1985
  %1987 = vmatmul.bf16.gmra.mxu0 %v1092
  %v1988 = vpop.f32.mrf.mxu0
  %v1989 = vadd.f32 %v1945, %v1988
  %v1990 = vpop.f32.mrf.mxu0
  %v1991 = vadd.f32 %v1947, %v1990
  %1992 = vmatmul.bf16.gmra.mxu0 %v1100
  %v1993 = vpop.f32.mrf.mxu0
  %v1994 = vadd.f32 %v1950, %v1993
  %v1995 = vpop.f32.mrf.mxu0
  %v1996 = vadd.f32 %v1952, %v1995
  %1997 = vmatmul.bf16.gmra.mxu0 %v1108
  %v1998 = vpop.f32.mrf.mxu0
  %v1999 = vadd.f32 %v1955, %v1998
  %v2000 = vpop.f32.mrf.mxu0
  %v2001 = vadd.f32 %v1957, %v2000
  %2002 = vmatmul.bf16.gmra.mxu0 %v1111
  %v2003 = vpop.f32.mrf.mxu0
  %v2004 = vadd.f32 %v1960, %v2003
  %v2005 = vpop.f32.mrf.mxu0
  %v2006 = vadd.f32 %v1962, %v2005
  %2007 = vdwg.mxu0
  %2008 = vmatpush.bf16.msra.mxu0 %v1587
  %2009 = vmatpush.bf16.msra.mxu0 %v1585
  %2010 = vmatpush.bf16.msra.mxu0 %v1583
  %2011 = vmatpush.bf16.msra.mxu0 %v1581
  %2012 = vmatpush.bf16.msra.mxu0 %v1579
  %2013 = vmatpush.bf16.msra.mxu0 %v1577
  %2014 = vmatpush.bf16.msra.mxu0 %v1575
  %2015 = vmatpush.bf16.msra.mxu0 %v1573
  %2016 = vmatmul.bf16.gmra.mxu0 %v1124
  %v2017 = vpop.f32.mrf.mxu0
  %v2018 = vadd.f32 %v1974, %v2017
  %v2019 = vpop.f32.mrf.mxu0
  %v2020 = vadd.f32 %v1976, %v2019
  %2021 = vmatmul.bf16.gmra.mxu0 %v1126
  %v2022 = vpop.f32.mrf.mxu0
  %v2023 = vadd.f32 %v1979, %v2022
  %v2024 = vpop.f32.mrf.mxu0
  %v2025 = vadd.f32 %v1981, %v2024
  %2026 = vmatmul.bf16.gmra.mxu0 %v1128
  %v2027 = vpop.f32.mrf.mxu0
  %v2028 = vadd.f32 %v1984, %v2027
  %v2029 = vpop.f32.mrf.mxu0
  %v2030 = vadd.f32 %v1986, %v2029
  %2031 = vmatmul.bf16.gmra.mxu0 %v1130
  %v2032 = vpop.f32.mrf.mxu0
  %v2033 = vadd.f32 %v1989, %v2032
  %v2034 = vpop.f32.mrf.mxu0
  %v2035 = vadd.f32 %v1991, %v2034
  %2036 = vmatmul.bf16.gmra.mxu0 %v1132
  %v2037 = vpop.f32.mrf.mxu0
  %v2038 = vadd.f32 %v1994, %v2037
  %v2039 = vpop.f32.mrf.mxu0
  %v2040 = vadd.f32 %v1996, %v2039
  %2041 = vmatmul.bf16.gmra.mxu0 %v1134
  %v2042 = vpop.f32.mrf.mxu0
  %v2043 = vadd.f32 %v1999, %v2042
  %v2044 = vpop.f32.mrf.mxu0
  %v2045 = vadd.f32 %v2001, %v2044
  %2046 = vmatmul.bf16.gmra.mxu0 %v1133
  %v2047 = vpop.f32.mrf.mxu0
  %v2048 = vadd.f32 %v2004, %v2047
  %v2049 = vpop.f32.mrf.mxu0
  %v2050 = vadd.f32 %v2006, %v2049
  %2051 = vdwg.mxu0
  %2052 = vmatpush.bf16.msra.mxu0 %v1603
  %2053 = vmatpush.bf16.msra.mxu0 %v1601
  %2054 = vmatpush.bf16.msra.mxu0 %v1599
  %2055 = vmatpush.bf16.msra.mxu0 %v1597
  %2056 = vmatpush.bf16.msra.mxu0 %v1595
  %2057 = vmatpush.bf16.msra.mxu0 %v1593
  %2058 = vmatpush.bf16.msra.mxu0 %v1591
  %2059 = vmatpush.bf16.msra.mxu0 %v1589
  %2060 = vmatmul.bf16.gmra.mxu0 %v1157
  %v2061 = vpop.f32.mrf.mxu0
  %v2062 = vadd.f32 %v2018, %v2061
  %v2063 = vpop.f32.mrf.mxu0
  %v2064 = vadd.f32 %v2020, %v2063
  %2065 = vmatmul.bf16.gmra.mxu0 %v1161
  %v2066 = vpop.f32.mrf.mxu0
  %v2067 = vadd.f32 %v2023, %v2066
  %v2068 = vpop.f32.mrf.mxu0
  %v2069 = vadd.f32 %v2025, %v2068
  %2070 = vmatmul.bf16.gmra.mxu0 %v1165
  %v2071 = vpop.f32.mrf.mxu0
  %v2072 = vadd.f32 %v2028, %v2071
  %v2073 = vpop.f32.mrf.mxu0
  %v2074 = vadd.f32 %v2030, %v2073
  %2075 = vmatmul.bf16.gmra.mxu0 %v1169
  %v2076 = vpop.f32.mrf.mxu0
  %v2077 = vadd.f32 %v2033, %v2076
  %v2078 = vpop.f32.mrf.mxu0
  %v2079 = vadd.f32 %v2035, %v2078
  %2080 = vmatmul.bf16.gmra.mxu0 %v1173
  %v2081 = vpop.f32.mrf.mxu0
  %v2082 = vadd.f32 %v2038, %v2081
  %v2083 = vpop.f32.mrf.mxu0
  %v2084 = vadd.f32 %v2040, %v2083
  %2085 = vmatmul.bf16.gmra.mxu0 %v1182
  %v2086 = vpop.f32.mrf.mxu0
  %v2087 = vadd.f32 %v2043, %v2086
  %v2088 = vpop.f32.mrf.mxu0
  %v2089 = vadd.f32 %v2045, %v2088
  %2090 = vmatmul.bf16.gmra.mxu0 %v1181
  %v2091 = vpop.f32.mrf.mxu0
  %v2092 = vadd.f32 %v2048, %v2091
  %v2093 = vpop.f32.mrf.mxu0
  %v2094 = vadd.f32 %v2050, %v2093
  %2095 = vdwg.mxu0
  %2096 = vmatpush.bf16.msra.mxu0 %v1619
  %2097 = vmatpush.bf16.msra.mxu0 %v1617
  %2098 = vmatpush.bf16.msra.mxu0 %v1615
  %2099 = vmatpush.bf16.msra.mxu0 %v1613
  %2100 = vmatpush.bf16.msra.mxu0 %v1611
  %2101 = vmatpush.bf16.msra.mxu0 %v1609
  %2102 = vmatpush.bf16.msra.mxu0 %v1607
  %2103 = vmatpush.bf16.msra.mxu0 %v1605
  %2104 = vmatmul.bf16.gmra.mxu0 %v1196
  %v2105 = vpop.f32.mrf.mxu0
  %v2106 = vadd.f32 %v2062, %v2105
  %v2107 = vpop.f32.mrf.mxu0
  %v2108 = vadd.f32 %v2064, %v2107
  %2109 = vmatmul.bf16.gmra.mxu0 %v1198
  %v2110 = vpop.f32.mrf.mxu0
  %v2111 = vadd.f32 %v2067, %v2110
  %v2112 = vpop.f32.mrf.mxu0
  %v2113 = vadd.f32 %v2069, %v2112
  %2114 = vmatmul.bf16.gmra.mxu0 %v1200
  %v2115 = vpop.f32.mrf.mxu0
  %v2116 = vadd.f32 %v2072, %v2115
  %v2117 = vpop.f32.mrf.mxu0
  %v2118 = vadd.f32 %v2074, %v2117
  %2119 = vmatmul.bf16.gmra.mxu0 %v1202
  %v2120 = vpop.f32.mrf.mxu0
  %v2121 = vadd.f32 %v2077, %v2120
  %v2122 = vpop.f32.mrf.mxu0
  %v2123 = vadd.f32 %v2079, %v2122
  %2124 = vmatmul.bf16.gmra.mxu0 %v1204
  %v2125 = vpop.f32.mrf.mxu0
  %v2126 = vadd.f32 %v2082, %v2125
  %v2127 = vpop.f32.mrf.mxu0
  %v2128 = vadd.f32 %v2084, %v2127
  %2129 = vmatmul.bf16.gmra.mxu0 %v1206
  %v2130 = vpop.f32.mrf.mxu0
  %v2131 = vadd.f32 %v2087, %v2130
  %v2132 = vpop.f32.mrf.mxu0
  %v2133 = vadd.f32 %v2089, %v2132
  %2134 = vmatmul.bf16.gmra.mxu0 %v1205
  %v2135 = vpop.f32.mrf.mxu0
  %v2136 = vadd.f32 %v2092, %v2135
  %v2137 = vpop.f32.mrf.mxu0
  %v2138 = vadd.f32 %v2094, %v2137
  %2139 = vdwg.mxu0
  %v2140 = vmax.f32 %v1886, 0.0
  %v2141 = vmax.f32 %v2106, 0.0
  %v2142 = vmax.f32 %v1888, 0.0
  %v2143 = vmax.f32 %v2108, 0.0
  %v2144 = vmax.f32 %v1891, 0.0
  %v2145 = vmax.f32 %v2111, 0.0
  %v2146 = vmax.f32 %v1893, 0.0
  %v2147 = vmax.f32 %v2113, 0.0
  %v2148 = vmax.f32 %v1896, 0.0
  %v2149 = vmax.f32 %v2116, 0.0
  %v2150 = vmax.f32 %v1898, 0.0
  %v2151 = vmax.f32 %v2118, 0.0
  %v2152 = vmax.f32 %v1901, 0.0
  %v2153 = vmax.f32 %v2121, 0.0
  %v2154 = vmax.f32 %v1903, 0.0
  %v2155 = vmax.f32 %v2123, 0.0
  %v2156 = vmax.f32 %v1906, 0.0
  %v2157 = vmax.f32 %v2126, 0.0
  %v2158 = vmax.f32 %v1908, 0.0
  %v2159 = vmax.f32 %v2128, 0.0
  %v2160 = vmax.f32 %v1911, 0.0
  %v2161 = vmax.f32 %v2131, 0.0
  %v2162 = vmax.f32 %v1913, 0.0
  %v2163 = vmax.f32 %v2133, 0.0
  %v2164 = vmax.f32 %v1916, 0.0
  %v2165 = vmax.f32 %v2136, 0.0
  %v2166 = vmax.f32 %v1918, 0.0
  %v2167 = vmax.f32 %v2138, 0.0
  %vm2196 = vcmask 1046528
  %v2197 = vrot.slane %v2140, 1
  %v2198 = vrot.slane %v2142, 1
  %v2199 = vsel %vm2196, %v2197, %v2198
  %v2200 = vrot.slane %v2141, 1
  %v2201 = vrot.slane %v2143, 1
  %v2202 = vsel %vm2196, %v2200, %v2201
  %v2203 = vrot.slane %v2144, 1
  %v2204 = vsel %vm2196, %v2198, %v2203
  %v2205 = vrot.slane %v2145, 1
  %v2206 = vsel %vm2196, %v2201, %v2205
  %v2207 = vrot.slane %v2146, 1
  %v2208 = vsel %vm2196, %v2203, %v2207
  %v2209 = vrot.slane %v2147, 1
  %v2210 = vsel %vm2196, %v2205, %v2209
  %v2211 = vrot.slane %v2148, 1
  %v2212 = vsel %vm2196, %v2207, %v2211
  %v2213 = vrot.slane %v2149, 1
  %v2214 = vsel %vm2196, %v2209, %v2213
  %v2215 = vrot.slane %v2150, 1
  %v2216 = vsel %vm2196, %v2211, %v2215
  %v2217 = vrot.slane %v2151, 1
  %v2218 = vsel %vm2196, %v2213, %v2217
  %v2219 = vrot.slane %v2152, 1
  %v2220 = vsel %vm2196, %v2215, %v2219
  %v2221 = vrot.slane %v2153, 1
  %v2222 = vsel %vm2196, %v2217, %v2221
  %v2223 = vrot.slane %v2154, 1
  %v2224 = vsel %vm2196, %v2219, %v2223
  %v2225 = vrot.slane %v2155, 1
  %v2226 = vsel %vm2196, %v2221, %v2225
  %v2227 = vrot.slane %v2156, 1
  %v2228 = vsel %vm2196, %v2223, %v2227
  %v2229 = vrot.slane %v2157, 1
  %v2230 = vsel %vm2196, %v2225, %v2229
  %v2231 = vrot.slane %v2158, 1
  %v2232 = vsel %vm2196, %v2227, %v2231
  %v2233 = vrot.slane %v2159, 1
  %v2234 = vsel %vm2196, %v2229, %v2233
  %v2235 = vrot.slane %v2160, 1
  %v2236 = vsel %vm2196, %v2231, %v2235
  %v2237 = vrot.slane %v2161, 1
  %v2238 = vsel %vm2196, %v2233, %v2237
  %v2239 = vrot.slane %v2162, 1
  %v2240 = vsel %vm2196, %v2235, %v2239
  %v2241 = vrot.slane %v2163, 1
  %v2242 = vsel %vm2196, %v2237, %v2241
  %v2243 = vrot.slane %v2164, 1
  %v2244 = vsel %vm2196, %v2239, %v2243
  %v2245 = vrot.slane %v2165, 1
  %v2246 = vsel %vm2196, %v2241, %v2245
  %v2247 = vrot.slane %v2166, 1
  %v2248 = vsel %vm2196, %v2243, %v2247
  %v2249 = vrot.slane %v2167, 1
  %v2250 = vsel %vm2196, %v2245, %v2249
  %v2279 = vmax.f32 %v2140, %v2199
  %v2280 = vmax.f32 %v2141, %v2202
  %v2281 = vmax.f32 %v2142, %v2204
  %v2282 = vmax.f32 %v2143, %v2206
  %v2283 = vmax.f32 %v2144, %v2208
  %v2284 = vmax.f32 %v2145, %v2210
  %v2285 = vmax.f32 %v2146, %v2212
  %v2286 = vmax.f32 %v2147, %v2214
  %v2287 = vmax.f32 %v2148, %v2216
  %v2288 = vmax.f32 %v2149, %v2218
  %v2289 = vmax.f32 %v2150, %v2220
  %v2290 = vmax.f32 %v2151, %v2222
  %v2291 = vmax.f32 %v2152, %v2224
  %v2292 = vmax.f32 %v2153, %v2226
  %v2293 = vmax.f32 %v2154, %v2228
  %v2294 = vmax.f32 %v2155, %v2230
  %v2295 = vmax.f32 %v2156, %v2232
  %v2296 = vmax.f32 %v2157, %v2234
  %v2297 = vmax.f32 %v2158, %v2236
  %v2298 = vmax.f32 %v2159, %v2238
  %v2299 = vmax.f32 %v2160, %v2240
  %v2300 = vmax.f32 %v2161, %v2242
  %v2301 = vmax.f32 %v2162, %v2244
  %v2302 = vmax.f32 %v2163, %v2246
  %v2303 = vmax.f32 %v2164, %v2248
  %v2304 = vmax.f32 %v2165, %v2250
  %v2305 = vmax.f32 %v2166, %v2247
  %v2306 = vmax.f32 %v2167, %v2249
  %v2307 = vmax.f32 %v2279, %v2280
  %v2308 = vmax.f32 %v2281, %v2282
  %v2309 = vmax.f32 %v2283, %v2284
  %v2310 = vmax.f32 %v2285, %v2286
  %v2311 = vmax.f32 %v2287, %v2288
  %v2312 = vmax.f32 %v2289, %v2290
  %v2313 = vmax.f32 %v2291, %v2292
  %v2314 = vmax.f32 %v2293, %v2294
  %v2315 = vmax.f32 %v2295, %v2296
  %v2316 = vmax.f32 %v2297, %v2298
  %v2317 = vmax.f32 %v2299, %v2300
  %v2318 = vmax.f32 %v2301, %v2302
  %v2319 = vmax.f32 %v2303, %v2304
  %v2320 = vmax.f32 %v2305, %v2306
  %2321 = vst [vmem:[#allocation3] sm:$0xff] %v2307
  %2322 = vst [vmem:[#allocation3 + $0x8] sm:$0xff] %v2308
  %2323 = vst [vmem:[#allocation3 + $0x10] sm:$0xff] %v2309
  %2324 = vst [vmem:[#allocation3 + $0x18] sm:$0xff] %v2310
  %2325 = vst [vmem:[#allocation3 + $0x20] sm:$0xff] %v2311
  %2326 = vst [vmem:[#allocation3 + $0x28] sm:$0xff] %v2312
  %2327 = vst [vmem:[#allocation3 + $0x30] sm:$0xff] %v2313
  %2328 = vst [vmem:[#allocation3 + $0x38] sm:$0xff] %v2314
  %2329 = vst [vmem:[#allocation3 + $0x40] sm:$0xff] %v2315
  %2330 = vst [vmem:[#allocation3 + $0x48] sm:$0xff] %v2316
  %2331 = vst [vmem:[#allocation3 + $0x50] sm:$0xff] %v2317
  %2332 = vst [vmem:[#allocation3 + $0x58] sm:$0xff] %v2318
  %2333 = vst [vmem:[#allocation3 + $0x60] sm:$0xff] %v2319
  %2334 = vst [vmem:[#allocation3 + $0x68] sm:$0x1] %v2320
  %v2335 = vld [vmem:[#allocation3] ss:$14 sm:$0xff]
  %s2336 = scalar_lea.vmem [#allocation3], 2
  %v2337 = vld [vmem:[%s2336] ss:$14 sm:$0xff]
  %s2338 = scalar_lea.vmem [#allocation3], 4
  %v2339 = vld [vmem:[%s2338] ss:$14 sm:$0xff]
  %s2340 = scalar_lea.vmem [#allocation3], 6
  %v2341 = vld [vmem:[%s2340] ss:$14 sm:$0xff]
  %v2342 = vpack.c.bf16 %v2335, %v2335
  %v2343 = vpack.c.bf16 %v2337, %v2337
  %v2344 = vpack.c.bf16 %v2339, %v2339
  %v2345 = vpack.c.bf16 %v2341, %v2341
  %v2346 = vld [vmem:[%s5] sm:$0xf]
  %v2347 = vld [vmem:[%s5 + $0x4] sm:$0xf]
  %v2348 = vld [vmem:[%s5 + $0x8] sm:$0xf]
  %v2349 = vld [vmem:[%s5 + $0xc] sm:$0xf]
  %v2350 = vld [vmem:[%s5 + $0x10] sm:$0xf]
  %v2351 = vld [vmem:[%s5 + $0x14] sm:$0xf]
  %v2352 = vld [vmem:[%s5 + $0x18] sm:$0xf]
  %v2353 = vld [vmem:[%s5 + $0x1c] sm:$0xf]
  %v2354 = vld [vmem:[%s5 + $0x20] sm:$0xf]
  %v2355 = vld [vmem:[%s5 + $0x24] sm:$0xf]
  %v2356 = vld [vmem:[%s5 + $0x28] sm:$0xf]
  %v2357 = vld [vmem:[%s5 + $0x2c] sm:$0xf]
  %v2358 = vld [vmem:[%s5 + $0x30] sm:$0xf]
  %v2359 = vld [vmem:[%s5 + $0x34] sm:$0xf]
  %v2360 = vld [vmem:[%s5 + $0x38] sm:$0xf]
  %v2361 = vld [vmem:[%s5 + $0x3c] sm:$0xf]
  %v2362 = vld [vmem:[%s5 + $0x40] sm:$0xf]
  %v2363 = vld [vmem:[%s5 + $0x44] sm:$0xf]
  %v2364 = vld [vmem:[%s5 + $0x48] sm:$0xf]
  %v2365 = vld [vmem:[%s5 + $0x4c] sm:$0xf]
  %v2366 = vld [vmem:[%s5 + $0x50] sm:$0xf]
  %v2367 = vld [vmem:[%s5 + $0x54] sm:$0xf]
  %v2368 = vld [vmem:[%s5 + $0x58] sm:$0xf]
  %v2369 = vld [vmem:[%s5 + $0x5c] sm:$0xf]
  %v2370 = vld [vmem:[%s5 + $0x60] sm:$0xf]
  %v2371 = vld [vmem:[%s5 + $0x64] sm:$0xf]
  %v2372 = vld [vmem:[%s5 + $0x68] sm:$0xf]
  %v2373 = vld [vmem:[%s5 + $0x6c] sm:$0xf]
  %v2374 = vld [vmem:[%s5 + $0x70] sm:$0xf]
  %v2375 = vld [vmem:[%s5 + $0x74] sm:$0xf]
  %v2376 = vld [vmem:[%s5 + $0x78] sm:$0xf]
  %v2377 = vld [vmem:[%s5 + $0x7c] sm:$0xf]
  %v2378 = vld [vmem:[%s5 + $0x80] sm:$0xf]
  %v2379 = vld [vmem:[%s5 + $0x84] sm:$0xf]
  %v2380 = vld [vmem:[%s5 + $0x88] sm:$0xf]
  %v2381 = vld [vmem:[%s5 + $0x8c] sm:$0xf]
  %v2382 = vld [vmem:[%s5 + $0x90] sm:$0xf]
  %v2383 = vld [vmem:[%s5 + $0x94] sm:$0xf]
  %v2384 = vld [vmem:[%s5 + $0x98] sm:$0xf]
  %v2385 = vld [vmem:[%s5 + $0x9c] sm:$0xf]
  %v2386 = vld [vmem:[%s5 + $0xa0] sm:$0xf]
  %v2387 = vld [vmem:[%s5 + $0xa4] sm:$0xf]
  %v2388 = vld [vmem:[%s5 + $0xa8] sm:$0xf]
  %v2389 = vld [vmem:[%s5 + $0xac] sm:$0xf]
  %v2390 = vld [vmem:[%s5 + $0xb0] sm:$0xf]
  %v2391 = vld [vmem:[%s5 + $0xb4] sm:$0xf]
  %v2392 = vld [vmem:[%s5 + $0xb8] sm:$0xf]
  %v2393 = vld [vmem:[%s5 + $0xbc] sm:$0xf]
  %v2394 = vld [vmem:[%s5 + $0xc0] sm:$0xf]
  %v2395 = vld [vmem:[%s5 + $0xc4] sm:$0xf]
  %v2396 = vld [vmem:[%s5 + $0xc8] sm:$0xf]
  %v2397 = vld [vmem:[%s5 + $0xcc] sm:$0xf]
  %v2398 = vld [vmem:[%s5 + $0xd0] sm:$0xf]
  %v2399 = vld [vmem:[%s5 + $0xd4] sm:$0xf]
  %v2400 = vld [vmem:[%s5 + $0xd8] sm:$0xf]
  %v2401 = vld [vmem:[%s5 + $0xdc] sm:$0xf]
  %v2402 = vld [vmem:[%s5 + $0xe0] sm:$0xf]
  %v2403 = vld [vmem:[%s5 + $0xe4] sm:$0xf]
  %v2404 = vld [vmem:[%s5 + $0xe8] sm:$0xf]
  %v2405 = vld [vmem:[%s5 + $0xec] sm:$0xf]
  %v2406 = vld [vmem:[%s5 + $0xf0] sm:$0xf]
  %v2407 = vld [vmem:[%s5 + $0xf4] sm:$0xf]
  %v2408 = vld [vmem:[%s5 + $0xf8] sm:$0xf]
  %v2409 = vld [vmem:[%s5 + $0xfc] sm:$0xf]
  %v2410 = vld [vmem:[%s6] sm:$0x1]
  %v2412 = vperm.slane %v2410, 0
  %v2478 = vunpack.c.l.b16 %v2346
  %v2479 = vunpack.c.l.b16 %v2347
  %v2480 = vunpack.c.l.b16 %v2348
  %v2481 = vunpack.c.l.b16 %v2349
  %v2482 = vunpack.c.l.b16 %v2350
  %v2483 = vunpack.c.l.b16 %v2351
  %v2484 = vunpack.c.l.b16 %v2352
  %v2485 = vunpack.c.l.b16 %v2353
  %v2486 = vunpack.c.l.b16 %v2354
  %v2487 = vunpack.c.l.b16 %v2355
  %v2488 = vunpack.c.l.b16 %v2356
  %v2489 = vunpack.c.l.b16 %v2357
  %v2490 = vunpack.c.l.b16 %v2358
  %v2491 = vunpack.c.l.b16 %v2359
  %v2492 = vunpack.c.l.b16 %v2360
  %v2493 = vunpack.c.l.b16 %v2361
  %v2494 = vunpack.c.l.b16 %v2362
  %v2495 = vunpack.c.l.b16 %v2363
  %v2496 = vunpack.c.l.b16 %v2364
  %v2497 = vunpack.c.l.b16 %v2365
  %v2498 = vunpack.c.l.b16 %v2366
  %v2499 = vunpack.c.l.b16 %v2367
  %v2500 = vunpack.c.l.b16 %v2368
  %v2501 = vunpack.c.l.b16 %v2369
  %v2502 = vunpack.c.l.b16 %v2370
  %v2503 = vunpack.c.l.b16 %v2371
  %v2504 = vunpack.c.l.b16 %v2372
  %v2505 = vunpack.c.l.b16 %v2373
  %v2506 = vunpack.c.l.b16 %v2374
  %v2507 = vunpack.c.l.b16 %v2375
  %v2508 = vunpack.c.l.b16 %v2376
  %v2509 = vunpack.c.l.b16 %v2377
  %v2510 = vunpack.c.l.b16 %v2378
  %v2511 = vunpack.c.l.b16 %v2379
  %v2512 = vunpack.c.l.b16 %v2380
  %v2513 = vunpack.c.l.b16 %v2381
  %v2514 = vunpack.c.l.b16 %v2382
  %v2515 = vunpack.c.l.b16 %v2383
  %v2516 = vunpack.c.l.b16 %v2384
  %v2517 = vunpack.c.l.b16 %v2385
  %v2518 = vunpack.c.l.b16 %v2386
  %v2519 = vunpack.c.l.b16 %v2387
  %v2520 = vunpack.c.l.b16 %v2388
  %v2521 = vunpack.c.l.b16 %v2389
  %v2522 = vunpack.c.l.b16 %v2390
  %v2523 = vunpack.c.l.b16 %v2391
  %v2524 = vunpack.c.l.b16 %v2392
  %v2525 = vunpack.c.l.b16 %v2393
  %v2526 = vunpack.c.l.b16 %v2394
  %v2527 = vunpack.c.l.b16 %v2395
  %v2528 = vunpack.c.l.b16 %v2396
  %v2529 = vunpack.c.l.b16 %v2397
  %v2530 = vunpack.c.l.b16 %v2398
  %v2531 = vunpack.c.l.b16 %v2399
  %v2532 = vunpack.c.l.b16 %v2400
  %v2533 = vunpack.c.l.b16 %v2401
  %v2534 = vunpack.c.l.b16 %v2402
  %v2535 = vunpack.c.l.b16 %v2403
  %v2536 = vunpack.c.l.b16 %v2404
  %v2537 = vunpack.c.l.b16 %v2405
  %v2538 = vunpack.c.l.b16 %v2406
  %v2539 = vunpack.c.l.b16 %v2407
  %v2540 = vunpack.c.l.b16 %v2408
  %v2541 = vunpack.c.l.b16 %v2409
  %v2542 = vpack.c.b16 %v2479, %v2478
  %v2543 = vpack.c.b16 %v2481, %v2480
  %v2544 = vpack.c.b16 %v2483, %v2482
  %v2545 = vpack.c.b16 %v2485, %v2484
  %v2546 = vpack.c.b16 %v2487, %v2486
  %v2547 = vpack.c.b16 %v2489, %v2488
  %v2548 = vpack.c.b16 %v2491, %v2490
  %v2549 = vpack.c.b16 %v2493, %v2492
  %v2550 = vpack.c.b16 %v2495, %v2494
  %v2551 = vpack.c.b16 %v2497, %v2496
  %v2552 = vpack.c.b16 %v2499, %v2498
  %v2553 = vpack.c.b16 %v2501, %v2500
  %v2554 = vpack.c.b16 %v2503, %v2502
  %v2555 = vpack.c.b16 %v2505, %v2504
  %v2556 = vpack.c.b16 %v2507, %v2506
  %v2557 = vpack.c.b16 %v2509, %v2508
  %v2558 = vpack.c.b16 %v2511, %v2510
  %v2559 = vpack.c.b16 %v2513, %v2512
  %v2560 = vpack.c.b16 %v2515, %v2514
  %v2561 = vpack.c.b16 %v2517, %v2516
  %v2562 = vpack.c.b16 %v2519, %v2518
  %v2563 = vpack.c.b16 %v2521, %v2520
  %v2564 = vpack.c.b16 %v2523, %v2522
  %v2565 = vpack.c.b16 %v2525, %v2524
  %v2566 = vpack.c.b16 %v2527, %v2526
  %v2567 = vpack.c.b16 %v2529, %v2528
  %v2568 = vpack.c.b16 %v2531, %v2530
  %v2569 = vpack.c.b16 %v2533, %v2532
  %v2570 = vpack.c.b16 %v2535, %v2534
  %v2571 = vpack.c.b16 %v2537, %v2536
  %v2572 = vpack.c.b16 %v2539, %v2538
  %v2573 = vpack.c.b16 %v2541, %v2540
  %2606 = vmatpush.bf16.msra.mxu0 %v2549
  %2607 = vmatpush.bf16.msra.mxu0 %v2548
  %2608 = vmatpush.bf16.msra.mxu0 %v2547
  %2609 = vmatpush.bf16.msra.mxu0 %v2546
  %2610 = vmatpush.bf16.msra.mxu0 %v2545
  %2611 = vmatpush.bf16.msra.mxu0 %v2544
  %2612 = vmatpush.bf16.msra.mxu0 %v2543
  %2613 = vmatpush.bf16.msra.mxu0 %v2542
  %2614 = vmatmul.bf16.gmra.mxu0 %v2342
  %v2615 = vpop.f32.mrf.mxu0
  %v2616 = vadd.f32 %v2412, %v2615
  %v2617 = vpop.f32.mrf.mxu0
  %2618 = vdwg.mxu0
  %2619 = vmatpush.bf16.msra.mxu0 %v2557
  %2620 = vmatpush.bf16.msra.mxu0 %v2556
  %2621 = vmatpush.bf16.msra.mxu0 %v2555
  %2622 = vmatpush.bf16.msra.mxu0 %v2554
  %2623 = vmatpush.bf16.msra.mxu0 %v2553
  %2624 = vmatpush.bf16.msra.mxu0 %v2552
  %2625 = vmatpush.bf16.msra.mxu0 %v2551
  %2626 = vmatpush.bf16.msra.mxu0 %v2550
  %2627 = vmatmul.bf16.gmra.mxu0 %v2343
  %v2628 = vpop.f32.mrf.mxu0
  %v2629 = vadd.f32 %v2616, %v2628
  %v2630 = vpop.f32.mrf.mxu0
  %2631 = vdwg.mxu0
  %2632 = vmatpush.bf16.msra.mxu0 %v2565
  %2633 = vmatpush.bf16.msra.mxu0 %v2564
  %2634 = vmatpush.bf16.msra.mxu0 %v2563
  %2635 = vmatpush.bf16.msra.mxu0 %v2562
  %2636 = vmatpush.bf16.msra.mxu0 %v2561
  %2637 = vmatpush.bf16.msra.mxu0 %v2560
  %2638 = vmatpush.bf16.msra.mxu0 %v2559
  %2639 = vmatpush.bf16.msra.mxu0 %v2558
  %2640 = vmatmul.bf16.gmra.mxu0 %v2344
  %v2641 = vpop.f32.mrf.mxu0
  %v2642 = vadd.f32 %v2629, %v2641
  %v2643 = vpop.f32.mrf.mxu0
  %2644 = vdwg.mxu0
  %2645 = vmatpush.bf16.msra.mxu0 %v2573
  %2646 = vmatpush.bf16.msra.mxu0 %v2572
  %2647 = vmatpush.bf16.msra.mxu0 %v2571
  %2648 = vmatpush.bf16.msra.mxu0 %v2570
  %2649 = vmatpush.bf16.msra.mxu0 %v2569
  %2650 = vmatpush.bf16.msra.mxu0 %v2568
  %2651 = vmatpush.bf16.msra.mxu0 %v2567
  %2652 = vmatpush.bf16.msra.mxu0 %v2566
  %2653 = vmatmul.bf16.gmra.mxu0 %v2345
  %v2654 = vpop.f32.mrf.mxu0
  %v2655 = vadd.f32 %v2642, %v2654
  %v2656 = vpop.f32.mrf.mxu0
  %2657 = vdwg.mxu0
  %v2658 = vmax.f32 %v2655, 0.0
  %v2659 = vpack.c.bf16 %v2658, %v2658
  %v2660 = vld [vmem:[%s7] sm:$0xf]
  %v2661 = vld [vmem:[%s7 + $0x4] sm:$0xf]
  %v2662 = vld [vmem:[%s7 + $0x8] sm:$0xf]
  %v2663 = vld [vmem:[%s7 + $0xc] sm:$0xf]
  %v2664 = vld [vmem:[%s7 + $0x10] sm:$0xf]
  %v2665 = vld [vmem:[%s7 + $0x14] sm:$0xf]
  %v2666 = vld [vmem:[%s7 + $0x18] sm:$0xf]
  %v2667 = vld [vmem:[%s7 + $0x1c] sm:$0xf]
  %v2668 = vld [vmem:[%s8] sm:$0x1]
  %v2670 = vperm.slane %v2668, 0
  %v2680 = vunpack.c.l.b16 %v2660
  %v2681 = vunpack.c.l.b16 %v2661
  %v2682 = vunpack.c.l.b16 %v2662
  %v2683 = vunpack.c.l.b16 %v2663
  %v2684 = vunpack.c.l.b16 %v2664
  %v2685 = vunpack.c.l.b16 %v2665
  %v2686 = vunpack.c.l.b16 %v2666
  %v2687 = vunpack.c.l.b16 %v2667
  %v2688 = vpack.c.b16 %v2681, %v2680
  %v2689 = vpack.c.b16 %v2683, %v2682
  %v2690 = vpack.c.b16 %v2685, %v2684
  %v2691 = vpack.c.b16 %v2687, %v2686
  %vm2696 = vcmask 523264
  %v2698 = vsel %vm2696, %v2659, 0
  %2700 = vmatpush.bf16.msra.mxu0 0
  %2701 = vmatpush.bf16.msra.mxu0 0
  %2702 = vmatpush.bf16.msra.mxu0 0
  %2703 = vmatpush.bf16.msra.mxu0 0
  %2704 = vmatpush.bf16.msra.mxu0 %v2691
  %2705 = vmatpush.bf16.msra.mxu0 %v2690
  %2706 = vmatpush.bf16.msra.mxu0 %v2689
  %2707 = vmatpush.bf16.msra.mxu0 %v2688
  %2708 = vmatmul.bf16.gmra.mxu0 %v2698
  %v2709 = vpop.f32.mrf.mxu0
  %v2710 = vadd.f32 %v2670, %v2709
  %v2711 = vpop.f32.mrf.mxu0
  %2712 = vdwg.mxu0
  %v2713 = vmax.f32 %v2710, 0.0
  %2714 = vst [vmem:[%s9] sm:$0xff] %v2713
  // Predicated region
  $region38: #{mnist_convnet_forward.1} parent=0 // pred_check
    _
  $region39: #{mnist_convnet_forward.1} parent=0 // pred_check_branch
    %2716 = sbr.rel (0) target = $region41
  $region40: #{mnist_convnet_forward.1} parent=0 // pred_region
    _
  $region41: #{mnist_convnet_forward.1} parent=0 // pred_fallthru
    _
  // Predicated region
  $region42: #{mnist_convnet_forward.1} parent=0 // pred_check
    _
  $region43: #{mnist_convnet_forward.1} parent=0 // pred_check_branch
    %2718 = sbr.rel (0) target = $region45
  $region44: #{mnist_convnet_forward.1} parent=0 // pred_region
    _
  $region45: #{mnist_convnet_forward.1} parent=0 // pred_fallthru
    _

</llo_original>
